<compile_context>
chip_gen: v7x
topology: tpu7x:2x2x1
jax: 0.10.0
libtpu: 0.0.40
codegen_flags: <defaults>
</compile_context>

<pallas_src>
import functools

import jax
import jax.numpy as jnp
from jax.experimental import pallas as pl
from jax.experimental.pallas import tpu as pltpu

BN_EPS = 1e-5
_LANE = 128
_VMEM_LIMIT = 48 * 1024 * 1024  # < v7x 64 MiB/TC physical, > all scoped defaults


def _round_up(n, m):
    return (n + m - 1) // m * m


# ---------------------------------------------------------------------------
# in-kernel helpers
# ---------------------------------------------------------------------------
def _act(h, activation):
    if activation == "relu":
        return jnp.maximum(h, 0.0)
    if activation == "tanh":
        return jnp.tanh(h)
    raise ValueError(f"Unknown activation function: {activation}")


def _linear(h, w_ref, b_ref):
    # bf16 MXU matmul (cast done in-kernel on the VPU), f32 accumulation.
    return jnp.dot(h.astype(jnp.bfloat16), w_ref[...],
                   preferred_element_type=jnp.float32) + b_ref[...]


def _accum_stats(stats_ref, z, *, b_true, tb):
    """Accumulate per-feature [sum; sum_sq] into this core's (1, 2, F) slot.

    Grid is (cores, tiles_per_core); axis 1 is the reduction axis.  Rows past the
    true batch size (partial tail tile) are masked with a cheap (tb, 1) mask; the
    mask is skipped entirely at trace time when tb divides the true batch size.
    """
    c, i = pl.program_id(0), pl.program_id(1)
    if b_true % tb != 0:
        start = (c * pl.num_programs(1) + i) * tb
        row = jax.lax.broadcasted_iota(jnp.int32, (z.shape[0], 1), 0) + start
        z = jnp.where(row < b_true, z, 0.0)
    s = jnp.concatenate([jnp.sum(z, axis=0, keepdims=True),
                         jnp.sum(z * z, axis=0, keepdims=True)], axis=0)

    @pl.when(i == 0)
    def _():
        stats_ref[...] = s[None]

    @pl.when(i > 0)
    def _():
        stats_ref[...] = stats_ref[...] + s[None]


def _bn(z, stats_ref, g_ref, be_ref, *, b_true):
    """Training-mode BatchNorm1d from per-core partial [sum; sum_sq] slots."""
    s = jnp.sum(stats_ref[...], axis=0)        # (2, F): sum the per-core partials
    inv_b = 1.0 / float(b_true)
    mean = s[0:1, :] * inv_b
    ex2 = s[1:2, :] * inv_b
    var = jnp.maximum(ex2 - mean * mean, 0.0)
    return (z - mean) * jax.lax.rsqrt(var + BN_EPS) * g_ref[...] + be_ref[...]


# ---------------------------------------------------------------------------
# kernels
# ---------------------------------------------------------------------------
def _mlp_fused_kernel(x_ref, w1, b1, w2, b2, w3, b3, w4, b4, o_ref, *, activation):
    """Whole MLP (no BatchNorm) fused per batch tile."""
    h = _act(_linear(x_ref[...], w1, b1), activation)
    h = _act(_linear(h, w2, b2), activation)
    h = _act(_linear(h, w3, b3), activation)
    o_ref[...] = _linear(h, w4, b4)


def _mlp_fused_bn_kernel(x_ref, w1, b1, g1, be1, w2, b2, g2, be2,
                         w3, b3, g3, be3, w4, b4, o_ref, *, activation, b_true):
    """Single-tile BN fast path: the (exact, unpadded) batch is fully resident, so
    per-layer batch statistics are computed in-tile — no intermediate HBM traffic.
    """
    inv_b = 1.0 / float(b_true)

    def bn_act(z, g, be):
        mean = jnp.sum(z, axis=0, keepdims=True) * inv_b
        ex2 = jnp.sum(z * z, axis=0, keepdims=True) * inv_b
        var = jnp.maximum(ex2 - mean * mean, 0.0)
        return _act((z - mean) * jax.lax.rsqrt(var + BN_EPS) * g[...] + be[...],
                    activation)

    h = bn_act(_linear(x_ref[...], w1, b1), g1, be1)
    h = bn_act(_linear(h, w2, b2), g2, be2)
    h = bn_act(_linear(h, w3, b3), g3, be3)
    o_ref[...] = _linear(h, w4, b4)


def _linear_stats_kernel(x_ref, w_ref, b_ref, z_ref, stats_ref, *, b_true, tb):
    """Layer 1 (BN multi-tile): z = x @ W + b, full-batch stat accumulation."""
    z = _linear(x_ref[...], w_ref, b_ref)                 # f32
    _accum_stats(stats_ref, z, b_true=b_true, tb=tb)      # stats from pre-cast f32
    z_ref[...] = z.astype(z_ref.dtype)                    # bf16 intermediate


def _bn_act_linear_stats_kernel(z_ref, s_ref, g_ref, be_ref, w_ref, b_ref,
                                zo_ref, so_ref, *, activation, b_true, tb):
    """Layers 2-3 (BN multi-tile): normalize prev layer, activate, linear + stats."""
    h = _act(_bn(z_ref[...].astype(jnp.float32), s_ref, g_ref, be_ref,
                 b_true=b_true), activation)
    z = _linear(h, w_ref, b_ref)
    _accum_stats(so_ref, z, b_true=b_true, tb=tb)
    zo_ref[...] = z.astype(zo_ref.dtype)


def _bn_act_linear_kernel(z_ref, s_ref, g_ref, be_ref, w_ref, b_ref, o_ref,
                          *, activation, b_true):
    """Final layer (BN multi-tile): normalize layer 3, activate, fc4."""
    h = _act(_bn(z_ref[...].astype(jnp.float32), s_ref, g_ref, be_ref,
                 b_true=b_true), activation)
    o_ref[...] = _linear(h, w_ref, b_ref)


# ---------------------------------------------------------------------------
# wrapper
# ---------------------------------------------------------------------------
def _nbytes(*arrs):
    return sum(int(a.size) * a.dtype.itemsize for a in arrs)


def _cost(b, matmul_dims, nbytes, activation):
    flops = int(sum(2 * b * k * n for k, n in matmul_dims))
    trans = int(sum(b * n for _, n in matmul_dims)) if activation == "tanh" else 0
    return pl.CostEstimate(flops=flops, transcendentals=trans,
                           bytes_accessed=int(nbytes))


def dnn_forward(x, params, *, classes, activation="relu", batch_norm=True,
                block_b=512):
    """x: (B, ...) -> flattened to (B, in_features), like x.view(B, -1)."""
    B = x.shape[0]
    x2d = x.reshape(B, -1)                  # f32 streamed directly: no pad/cast pass
    fin = x2d.shape[1]
    assert params["w1"].shape[0] == fin, "params / in_features mismatch"

    block_b = max(16, _round_up(block_b, 16))
    tb = block_b if B > block_b else B      # single tile == exact batch (no padding)
    tiles = pl.cdiv(B, tb)

    w1, b1 = params["w1"], params["b1"]
    w2, b2 = params["w2"], params["b2"]
    w3, b3 = params["w3"], params["b3"]
    w4, b4 = params["w4"], params["b4"]
    f1, f2, f3, c_p = w1.shape[1], w2.shape[1], w3.shape[1], w4.shape[1]
    dims_all = [(fin, f1), (f1, f2), (f2, f3), (f3, c_p)]

    def const_spec(a, grid_rank):
        zeros = (0,) * a.ndim
        if grid_rank == 1:
            return pl.BlockSpec(a.shape, lambda i: zeros)
        return pl.BlockSpec(a.shape, lambda c, i: zeros)

    cp1 = pltpu.CompilerParams(dimension_semantics=("parallel",),
                               vmem_limit_bytes=_VMEM_LIMIT)

    # ------------------ no BatchNorm: single fully fused, fully parallel kernel
    if not batch_norm:
        args = (x2d, w1, b1, w2, b2, w3, b3, w4, b4)
        out = pl.pallas_call(
            functools.partial(_mlp_fused_kernel, activation=activation),
            grid=(tiles,),
            in_specs=[pl.BlockSpec((tb, fin), lambda i: (i, 0))]
                     + [const_spec(a, 1) for a in args[1:]],
            out_specs=pl.BlockSpec((tb, c_p), lambda i: (i, 0)),
            out_shape=jax.ShapeDtypeStruct((B, c_p), jnp.float32),
            compiler_params=cp1,
            cost_estimate=_cost(B, dims_all, _nbytes(*args) + B * c_p * 4,
                                activation),
        )(*args)
        return out[:, :classes]

    g1, be1 = params["g1"], params["be1"]
    g2, be2 = params["g2"], params["be2"]
    g3, be3 = params["g3"], params["be3"]

    # ------------------ BN, single-tile fast path: everything fused in VMEM
    if tiles == 1:
        args = (x2d, w1, b1, g1, be1, w2, b2, g2, be2, w3, b3, g3, be3, w4, b4)
        out = pl.pallas_call(
            functools.partial(_mlp_fused_bn_kernel, activation=activation,
                              b_true=B),
            grid=(1,),
            in_specs=[pl.BlockSpec((tb, fin), lambda i: (i, 0))]
                     + [const_spec(a, 1) for a in args[1:]],
            out_specs=pl.BlockSpec((tb, c_p), lambda i: (i, 0)),
            out_shape=jax.ShapeDtypeStruct((B, c_p), jnp.float32),
            compiler_params=cp1,
            cost_estimate=_cost(B, dims_all, _nbytes(*args) + B * c_p * 4,
                                activation),
        )(*args)
        return out[:, :classes]

    # ------------------ BN, multi-tile: 4 calls with cross-tile full-batch stats
    # v7x: split batch tiles across the 2 TensorCores (axis 0 "parallel"); each
    # core accumulates its own (1, 2, F) partial, consumers sum the slots.
    num_cores = 2 if tiles % 2 == 0 else 1
    tpc = tiles // num_cores

    def row_spec(f):
        return pl.BlockSpec((tb, f), lambda c, i: (c * tpc + i, 0))

    def stats_out_spec(f):
        return pl.BlockSpec((1, 2, f), lambda c, i: (c, 0, 0))

    def stats_in_spec(f):
        return pl.BlockSpec((num_cores, 2, f), lambda c, i: (0, 0, 0))

    cp_red = pltpu.CompilerParams(dimension_semantics=("parallel", "arbitrary"),
                                  vmem_limit_bytes=_VMEM_LIMIT)
    cp_par = pltpu.CompilerParams(dimension_semantics=("parallel", "parallel"),
                                  vmem_limit_bytes=_VMEM_LIMIT)

    # Layer 1: linear + full-batch [sum; sum_sq]; z1 stored as bf16.
    z1, s1 = pl.pallas_call(
        functools.partial(_linear_stats_kernel, b_true=B, tb=tb),
        grid=(num_cores, tpc),
        in_specs=[row_spec(fin), const_spec(w1, 2), const_spec(b1, 2)],
        out_specs=(row_spec(f1), stats_out_spec(f1)),
        out_shape=(jax.ShapeDtypeStruct((B, f1), jnp.bfloat16),
                   jax.ShapeDtypeStruct((num_cores, 2, f1), jnp.float32)),
        compiler_params=cp_red,
        cost_estimate=_cost(B, [(fin, f1)],
                            _nbytes(x2d, w1, b1) + B * f1 * 2, "none"),
    )(x2d, w1, b1)

    def bn_layer(z, s, g, be, w, b, f_in, f_out):
        return pl.pallas_call(
            functools.partial(_bn_act_linear_stats_kernel,
                              activation=activation, b_true=B, tb=tb),
            grid=(num_cores, tpc),
            in_specs=[row_spec(f_in), stats_in_spec(f_in),
                      const_spec(g, 2), const_spec(be, 2),
                      const_spec(w, 2), const_spec(b, 2)],
            out_specs=(row_spec(f_out), stats_out_spec(f_out)),
            out_shape=(jax.ShapeDtypeStruct((B, f_out), jnp.bfloat16),
                       jax.ShapeDtypeStruct((num_cores, 2, f_out), jnp.float32)),
            compiler_params=cp_red,
            cost_estimate=_cost(B, [(f_in, f_out)],
                                _nbytes(z, s, g, be, w, b) + B * f_out * 2,
                                activation),
        )(z, s, g, be, w, b)

    z2, s2 = bn_layer(z1, s1, g1, be1, w2, b2, f1, f2)
    z3, s3 = bn_layer(z2, s2, g2, be2, w3, b3, f2, f3)

    out = pl.pallas_call(
        functools.partial(_bn_act_linear_kernel, activation=activation, b_true=B),
        grid=(num_cores, tpc),
        in_specs=[row_spec(f3), stats_in_spec(f3),
                  const_spec(g3, 2), const_spec(be3, 2),
                  const_spec(w4, 2), const_spec(b4, 2)],
        out_specs=row_spec(c_p),
        out_shape=jax.ShapeDtypeStruct((B, c_p), jnp.float32),
        compiler_params=cp_par,
        cost_estimate=_cost(B, [(f3, c_p)],
                            _nbytes(z3, s3, g3, be3, w4, b4) + B * c_p * 4,
                            activation),
    )(z3, s3, g3, be3, w4, b4)
    return out[:, :classes]


# ---------------------------------------------------------------------------
# params / reference
# ---------------------------------------------------------------------------
def init_params(key, in_features, classes, *, batch_norm=True):
    """nn.Linear-style init (U(-1/sqrt(fan_in), +)).  Layer outputs are padded to
    lane multiples with zeros (padded lanes stay exactly 0 through BN + act);
    fc1 keeps its true in_features on the K dim so x never needs feature padding.
    Weights stored transposed (in, out) in bf16."""
    dims = [(in_features, 500), (500, 200), (200, 50), (50, classes)]
    params = {}
    for idx, (fi, fo) in enumerate(dims, start=1):
        key, kw, kb = jax.random.split(key, 3)
        bound = 1.0 / (fi ** 0.5)
        w = jax.random.uniform(kw, (fi, fo), jnp.float32, -bound, bound)
        b = jax.random.uniform(kb, (1, fo), jnp.float32, -bound, bound)
        fi_p = fi if idx == 1 else _round_up(fi, _LANE)
        fo_p = _round_up(fo, _LANE)
        params[f"w{idx}"] = (jnp.zeros((fi_p, fo_p), jnp.float32)
                             .at[:fi, :fo].set(w)).astype(jnp.bfloat16)
        params[f"b{idx}"] = jnp.zeros((1, fo_p), jnp.float32).at[:, :fo].set(b)
        if batch_norm and idx <= 3:
            params[f"g{idx}"] = jnp.zeros((1, fo_p), jnp.float32).at[:, :fo].set(1.0)
            params[f"be{idx}"] = jnp.zeros((1, fo_p), jnp.float32)
    return params


def dnn_reference(x, params, *, classes, activation="relu", batch_norm=True,
                  bf16_intermediates=False):
    """Pure-JAX reference (bf16 matmul inputs, f32 accum).  With
    bf16_intermediates=True, mirrors the multi-tile kernel: BN statistics from the
    f32 pre-activation, normalization applied to the bf16-rounded value."""
    act = (lambda h: jnp.maximum(h, 0.0)) if activation == "relu" else jnp.tanh
    B = x.shape[0]
    h = x.reshape(B, -1).astype(jnp.float32)

    def lin(h, i):
        return jnp.dot(h.astype(jnp.bfloat16), params[f"w{i}"],
                       preferred_element_type=jnp.float32) + params[f"b{i}"]

    for i in (1, 2, 3):
        z = lin(h, i)
        if batch_norm:
            mean = jnp.mean(z, axis=0, keepdims=True)
            ex2 = jnp.mean(z * z, axis=0, keepdims=True)
            var = jnp.maximum(ex2 - mean * mean, 0.0)
            if bf16_intermediates:
                z = z.astype(jnp.bfloat16).astype(jnp.float32)
            z = (z - mean) * jax.lax.rsqrt(var + BN_EPS) * params[f"g{i}"] \
                + params[f"be{i}"]
        h = act(z)
    return lin(h, 4)[:, :classes]


# ---------------------------------------------------------------------------
# demo / self-check
# ---------------------------------------------------------------------------
if __name__ == "__main__":
    # cfg: in_features = 4*16*16 = 1024, classes = 10
    key = jax.random.PRNGKey(0)
    kx, kp = jax.random.split(key)
    IN_F, CLASSES = 4 * 16 * 16, 10

    x = jax.random.normal(kx, (2, 4, 16, 16), jnp.float32)
    params_bn = init_params(kp, IN_F, CLASSES, batch_norm=True)
    params_nb = init_params(kp, IN_F, CLASSES, batch_norm=False)

    # 1) BN path, small batch -> single-tile fully fused fast path (relu).
    out = jax.block_until_ready(
        dnn_forward(x, params_bn, classes=CLASSES, activation="relu",
                    batch_norm=True))
    ref = dnn_reference(x, params_bn, classes=CLASSES, activation="relu",
                        batch_norm=True)
    assert out.shape == (2, CLASSES), out.shape
    assert jnp.allclose(out, ref, atol=2e-3, rtol=2e-3), \
        f"BN fast-path max err {jnp.max(jnp.abs(out - ref))}"

    # 2) No-BN fused tiled path (tanh).
    out2 = jax.block_until_ready(
        dnn_forward(x, params_nb, classes=CLASSES, activation="tanh",
                    batch_norm=False))
    ref2 = dnn_reference(x, params_nb, classes=CLASSES, activation="tanh",
                         batch_norm=False)
    assert jnp.allclose(out2, ref2, atol=2e-3, rtol=2e-3), \
        f"no-BN max err {jnp.max(jnp.abs(out2 - ref2))}"

    # 3) BN multi-tile path, even tile count: B=64, block_b=16 -> grid (2, 2)
    #    (exercises the 2-core stats split and bf16 intermediate activations).
    xb = jax.random.normal(kx, (64, 4, 16, 16), jnp.float32)
    out3 = jax.block_until_ready(
        dnn_forward(xb, params_bn, classes=CLASSES, activation="relu",
                    batch_norm=True, block_b=16))
    ref3 = dnn_reference(xb, params_bn, classes=CLASSES, activation="relu",
                         batch_norm=True, bf16_intermediates=True)
    assert out3.shape == (64, CLASSES), out3.shape
    assert jnp.allclose(out3, ref3, atol=1e-2, rtol=1e-2), \
        f"tiled-BN max err {jnp.max(jnp.abs(out3 - ref3))}"

    # 4) BN multi-tile, odd tile count + partial tail tile: B=40, block_b=16
    #    (exercises the single-slot reduction grid and in-kernel tail masking).
    xc = jax.random.normal(kx, (40, 4, 16, 16), jnp.float32)
    out4 = jax.block_until_ready(
        dnn_forward(xc, params_bn, classes=CLASSES, activation="tanh",
                    batch_norm=True, block_b=16))
    ref4 = dnn_reference(xc, params_bn, classes=CLASSES, activation="tanh",
                         batch_norm=True, bf16_intermediates=True)
    assert jnp.allclose(out4, ref4, atol=1e-2, rtol=1e-2), \
        f"tail-mask BN max err {jnp.max(jnp.abs(out4 - ref4))}"

    print("KERNEL_OK")
</pallas_src>

<mosaic_0001>
module attributes {stable_mosaic.version = 11 : i64} {
  func.func @_mlp_fused_bn_kernel(%arg0: i32, %arg1: memref<2x1024xf32, #tpu.memory_space<vmem>>, %arg2: memref<1024x512xbf16, #tpu.memory_space<vmem>>, %arg3: memref<1x512xf32, #tpu.memory_space<vmem>>, %arg4: memref<1x512xf32, #tpu.memory_space<vmem>>, %arg5: memref<1x512xf32, #tpu.memory_space<vmem>>, %arg6: memref<512x256xbf16, #tpu.memory_space<vmem>>, %arg7: memref<1x256xf32, #tpu.memory_space<vmem>>, %arg8: memref<1x256xf32, #tpu.memory_space<vmem>>, %arg9: memref<1x256xf32, #tpu.memory_space<vmem>>, %arg10: memref<256x128xbf16, #tpu.memory_space<vmem>>, %arg11: memref<1x128xf32, #tpu.memory_space<vmem>>, %arg12: memref<1x128xf32, #tpu.memory_space<vmem>>, %arg13: memref<1x128xf32, #tpu.memory_space<vmem>>, %arg14: memref<128x128xbf16, #tpu.memory_space<vmem>>, %arg15: memref<1x128xf32, #tpu.memory_space<vmem>>, %arg16: memref<2x128xf32, #tpu.memory_space<vmem>>) attributes {dimension_semantics = [#tpu.dimension_semantics<parallel>], iteration_bounds = array<i64: 1>, scalar_prefetch = 0 : i64, scratch_operands = 0 : i64, tpu.core_type = #tpu.core_type<tc>, window_params = [{transform_indices = @transform_0, window_bounds = array<i64: 2, 1024>}, {pipeline_mode = #tpu.pipeline_mode<synchronous>, transform_indices = @transform_1, window_bounds = array<i64: 1024, 512>}, {pipeline_mode = #tpu.pipeline_mode<synchronous>, transform_indices = @transform_2, window_bounds = array<i64: 1, 512>}, {pipeline_mode = #tpu.pipeline_mode<synchronous>, transform_indices = @transform_3, window_bounds = array<i64: 1, 512>}, {pipeline_mode = #tpu.pipeline_mode<synchronous>, transform_indices = @transform_4, window_bounds = array<i64: 1, 512>}, {pipeline_mode = #tpu.pipeline_mode<synchronous>, transform_indices = @transform_5, window_bounds = array<i64: 512, 256>}, {pipeline_mode = #tpu.pipeline_mode<synchronous>, transform_indices = @transform_6, window_bounds = array<i64: 1, 256>}, {pipeline_mode = #tpu.pipeline_mode<synchronous>, transform_indices = @transform_7, window_bounds = array<i64: 1, 256>}, {pipeline_mode = #tpu.pipeline_mode<synchronous>, transform_indices = @transform_8, window_bounds = array<i64: 1, 256>}, {pipeline_mode = #tpu.pipeline_mode<synchronous>, transform_indices = @transform_9, window_bounds = array<i64: 256, 128>}, {pipeline_mode = #tpu.pipeline_mode<synchronous>, transform_indices = @transform_10, window_bounds = array<i64: 1, 128>}, {pipeline_mode = #tpu.pipeline_mode<synchronous>, transform_indices = @transform_11, window_bounds = array<i64: 1, 128>}, {pipeline_mode = #tpu.pipeline_mode<synchronous>, transform_indices = @transform_12, window_bounds = array<i64: 1, 128>}, {pipeline_mode = #tpu.pipeline_mode<synchronous>, transform_indices = @transform_13, window_bounds = array<i64: 128, 128>}, {pipeline_mode = #tpu.pipeline_mode<synchronous>, transform_indices = @transform_14, window_bounds = array<i64: 1, 128>}, {transform_indices = @transform_15, window_bounds = array<i64: 2, 128>}]} {
    %c0 = arith.constant 0 : index
    %c0_0 = arith.constant 0 : index
    %0 = vector.load %arg1[%c0, %c0_0] : memref<2x1024xf32, #tpu.memory_space<vmem>>, vector<2x1024xf32>
    %1 = arith.truncf %0 : vector<2x1024xf32> to vector<2x1024xbf16>
    %c0_1 = arith.constant 0 : index
    %c0_2 = arith.constant 0 : index
    %2 = vector.load %arg2[%c0_1, %c0_2] : memref<1024x512xbf16, #tpu.memory_space<vmem>>, vector<1024x512xbf16>
    %cst = arith.constant dense<0.000000e+00> : vector<2x512xf32>
    %3 = tpu.matmul %1, %2, %cst {dimension_numbers = #tpu.dot_dimension_numbers<[1], [0], [0], [1], [0, 0, 1, 1], [], []>} : vector<2x1024xbf16>, vector<1024x512xbf16>, vector<2x512xf32> -> vector<2x512xf32>
    %c0_3 = arith.constant 0 : index
    %c0_4 = arith.constant 0 : index
    %4 = vector.load %arg3[%c0_3, %c0_4] : memref<1x512xf32, #tpu.memory_space<vmem>>, vector<1x512xf32>
    %5 = vector.broadcast %4 : vector<1x512xf32> to vector<2x512xf32>
    %6 = arith.addf %3, %5 : vector<2x512xf32>
    %cst_5 = arith.constant dense<0.000000e+00> : vector<512xf32>
    %7 = vector.multi_reduction <add>, %6, %cst_5 [0] : vector<2x512xf32> to vector<512xf32>
    %8 = vector.shape_cast %7 : vector<512xf32> to vector<1x512xf32>
    %cst_6 = arith.constant 5.000000e-01 : f32
    %9 = vector.broadcast %cst_6 : f32 to vector<1x512xf32>
    %10 = arith.mulf %8, %9 : vector<1x512xf32>
    %11 = arith.mulf %6, %6 : vector<2x512xf32>
    %cst_7 = arith.constant dense<0.000000e+00> : vector<512xf32>
    %12 = vector.multi_reduction <add>, %11, %cst_7 [0] : vector<2x512xf32> to vector<512xf32>
    %13 = vector.shape_cast %12 : vector<512xf32> to vector<1x512xf32>
    %cst_8 = arith.constant 5.000000e-01 : f32
    %14 = vector.broadcast %cst_8 : f32 to vector<1x512xf32>
    %15 = arith.mulf %13, %14 : vector<1x512xf32>
    %16 = arith.mulf %10, %10 : vector<1x512xf32>
    %17 = arith.subf %15, %16 : vector<1x512xf32>
    %cst_9 = arith.constant 0.000000e+00 : f32
    %18 = vector.broadcast %cst_9 : f32 to vector<1x512xf32>
    %19 = arith.maximumf %17, %18 : vector<1x512xf32>
    %20 = vector.broadcast %10 : vector<1x512xf32> to vector<2x512xf32>
    %21 = arith.subf %6, %20 : vector<2x512xf32>
    %cst_10 = arith.constant 9.99999974E-6 : f32
    %22 = vector.broadcast %cst_10 : f32 to vector<1x512xf32>
    %23 = arith.addf %19, %22 : vector<1x512xf32>
    %24 = math.rsqrt %23 : vector<1x512xf32>
    %25 = vector.broadcast %24 : vector<1x512xf32> to vector<2x512xf32>
    %26 = arith.mulf %21, %25 : vector<2x512xf32>
    %c0_11 = arith.constant 0 : index
    %c0_12 = arith.constant 0 : index
    %27 = vector.load %arg4[%c0_11, %c0_12] : memref<1x512xf32, #tpu.memory_space<vmem>>, vector<1x512xf32>
    %28 = vector.broadcast %27 : vector<1x512xf32> to vector<2x512xf32>
    %29 = arith.mulf %26, %28 : vector<2x512xf32>
    %c0_13 = arith.constant 0 : index
    %c0_14 = arith.constant 0 : index
    %30 = vector.load %arg5[%c0_13, %c0_14] : memref<1x512xf32, #tpu.memory_space<vmem>>, vector<1x512xf32>
    %31 = vector.broadcast %30 : vector<1x512xf32> to vector<2x512xf32>
    %32 = arith.addf %29, %31 : vector<2x512xf32>
    %cst_15 = arith.constant 0.000000e+00 : f32
    %33 = vector.broadcast %cst_15 : f32 to vector<2x512xf32>
    %34 = arith.maximumf %32, %33 : vector<2x512xf32>
    %35 = arith.truncf %34 : vector<2x512xf32> to vector<2x512xbf16>
    %c0_16 = arith.constant 0 : index
    %c0_17 = arith.constant 0 : index
    %36 = vector.load %arg6[%c0_16, %c0_17] : memref<512x256xbf16, #tpu.memory_space<vmem>>, vector<512x256xbf16>
    %cst_18 = arith.constant dense<0.000000e+00> : vector<2x256xf32>
    %37 = tpu.matmul %35, %36, %cst_18 {dimension_numbers = #tpu.dot_dimension_numbers<[1], [0], [0], [1], [0, 0, 1, 1], [], []>} : vector<2x512xbf16>, vector<512x256xbf16>, vector<2x256xf32> -> vector<2x256xf32>
    %c0_19 = arith.constant 0 : index
    %c0_20 = arith.constant 0 : index
    %38 = vector.load %arg7[%c0_19, %c0_20] : memref<1x256xf32, #tpu.memory_space<vmem>>, vector<1x256xf32>
    %39 = vector.broadcast %38 : vector<1x256xf32> to vector<2x256xf32>
    %40 = arith.addf %37, %39 : vector<2x256xf32>
    %cst_21 = arith.constant dense<0.000000e+00> : vector<256xf32>
    %41 = vector.multi_reduction <add>, %40, %cst_21 [0] : vector<2x256xf32> to vector<256xf32>
    %42 = vector.shape_cast %41 : vector<256xf32> to vector<1x256xf32>
    %cst_22 = arith.constant 5.000000e-01 : f32
    %43 = vector.broadcast %cst_22 : f32 to vector<1x256xf32>
    %44 = arith.mulf %42, %43 : vector<1x256xf32>
    %45 = arith.mulf %40, %40 : vector<2x256xf32>
    %cst_23 = arith.constant dense<0.000000e+00> : vector<256xf32>
    %46 = vector.multi_reduction <add>, %45, %cst_23 [0] : vector<2x256xf32> to vector<256xf32>
    %47 = vector.shape_cast %46 : vector<256xf32> to vector<1x256xf32>
    %cst_24 = arith.constant 5.000000e-01 : f32
    %48 = vector.broadcast %cst_24 : f32 to vector<1x256xf32>
    %49 = arith.mulf %47, %48 : vector<1x256xf32>
    %50 = arith.mulf %44, %44 : vector<1x256xf32>
    %51 = arith.subf %49, %50 : vector<1x256xf32>
    %cst_25 = arith.constant 0.000000e+00 : f32
    %52 = vector.broadcast %cst_25 : f32 to vector<1x256xf32>
    %53 = arith.maximumf %51, %52 : vector<1x256xf32>
    %54 = vector.broadcast %44 : vector<1x256xf32> to vector<2x256xf32>
    %55 = arith.subf %40, %54 : vector<2x256xf32>
    %cst_26 = arith.constant 9.99999974E-6 : f32
    %56 = vector.broadcast %cst_26 : f32 to vector<1x256xf32>
    %57 = arith.addf %53, %56 : vector<1x256xf32>
    %58 = math.rsqrt %57 : vector<1x256xf32>
    %59 = vector.broadcast %58 : vector<1x256xf32> to vector<2x256xf32>
    %60 = arith.mulf %55, %59 : vector<2x256xf32>
    %c0_27 = arith.constant 0 : index
    %c0_28 = arith.constant 0 : index
    %61 = vector.load %arg8[%c0_27, %c0_28] : memref<1x256xf32, #tpu.memory_space<vmem>>, vector<1x256xf32>
    %62 = vector.broadcast %61 : vector<1x256xf32> to vector<2x256xf32>
    %63 = arith.mulf %60, %62 : vector<2x256xf32>
    %c0_29 = arith.constant 0 : index
    %c0_30 = arith.constant 0 : index
    %64 = vector.load %arg9[%c0_29, %c0_30] : memref<1x256xf32, #tpu.memory_space<vmem>>, vector<1x256xf32>
    %65 = vector.broadcast %64 : vector<1x256xf32> to vector<2x256xf32>
    %66 = arith.addf %63, %65 : vector<2x256xf32>
    %cst_31 = arith.constant 0.000000e+00 : f32
    %67 = vector.broadcast %cst_31 : f32 to vector<2x256xf32>
    %68 = arith.maximumf %66, %67 : vector<2x256xf32>
    %69 = arith.truncf %68 : vector<2x256xf32> to vector<2x256xbf16>
    %c0_32 = arith.constant 0 : index
    %c0_33 = arith.constant 0 : index
    %70 = vector.load %arg10[%c0_32, %c0_33] : memref<256x128xbf16, #tpu.memory_space<vmem>>, vector<256x128xbf16>
    %cst_34 = arith.constant dense<0.000000e+00> : vector<2x128xf32>
    %71 = tpu.matmul %69, %70, %cst_34 {dimension_numbers = #tpu.dot_dimension_numbers<[1], [0], [0], [1], [0, 0, 1, 1], [], []>} : vector<2x256xbf16>, vector<256x128xbf16>, vector<2x128xf32> -> vector<2x128xf32>
    %c0_35 = arith.constant 0 : index
    %c0_36 = arith.constant 0 : index
    %72 = vector.load %arg11[%c0_35, %c0_36] : memref<1x128xf32, #tpu.memory_space<vmem>>, vector<1x128xf32>
    %73 = vector.broadcast %72 : vector<1x128xf32> to vector<2x128xf32>
    %74 = arith.addf %71, %73 : vector<2x128xf32>
    %cst_37 = arith.constant dense<0.000000e+00> : vector<128xf32>
    %75 = vector.multi_reduction <add>, %74, %cst_37 [0] : vector<2x128xf32> to vector<128xf32>
    %76 = vector.shape_cast %75 : vector<128xf32> to vector<1x128xf32>
    %cst_38 = arith.constant 5.000000e-01 : f32
    %77 = vector.broadcast %cst_38 : f32 to vector<1x128xf32>
    %78 = arith.mulf %76, %77 : vector<1x128xf32>
    %79 = arith.mulf %74, %74 : vector<2x128xf32>
    %cst_39 = arith.constant dense<0.000000e+00> : vector<128xf32>
    %80 = vector.multi_reduction <add>, %79, %cst_39 [0] : vector<2x128xf32> to vector<128xf32>
    %81 = vector.shape_cast %80 : vector<128xf32> to vector<1x128xf32>
    %cst_40 = arith.constant 5.000000e-01 : f32
    %82 = vector.broadcast %cst_40 : f32 to vector<1x128xf32>
    %83 = arith.mulf %81, %82 : vector<1x128xf32>
    %84 = arith.mulf %78, %78 : vector<1x128xf32>
    %85 = arith.subf %83, %84 : vector<1x128xf32>
    %cst_41 = arith.constant 0.000000e+00 : f32
    %86 = vector.broadcast %cst_41 : f32 to vector<1x128xf32>
    %87 = arith.maximumf %85, %86 : vector<1x128xf32>
    %88 = vector.broadcast %78 : vector<1x128xf32> to vector<2x128xf32>
    %89 = arith.subf %74, %88 : vector<2x128xf32>
    %cst_42 = arith.constant 9.99999974E-6 : f32
    %90 = vector.broadcast %cst_42 : f32 to vector<1x128xf32>
    %91 = arith.addf %87, %90 : vector<1x128xf32>
    %92 = math.rsqrt %91 : vector<1x128xf32>
    %93 = vector.broadcast %92 : vector<1x128xf32> to vector<2x128xf32>
    %94 = arith.mulf %89, %93 : vector<2x128xf32>
    %c0_43 = arith.constant 0 : index
    %c0_44 = arith.constant 0 : index
    %95 = vector.load %arg12[%c0_43, %c0_44] : memref<1x128xf32, #tpu.memory_space<vmem>>, vector<1x128xf32>
    %96 = vector.broadcast %95 : vector<1x128xf32> to vector<2x128xf32>
    %97 = arith.mulf %94, %96 : vector<2x128xf32>
    %c0_45 = arith.constant 0 : index
    %c0_46 = arith.constant 0 : index
    %98 = vector.load %arg13[%c0_45, %c0_46] : memref<1x128xf32, #tpu.memory_space<vmem>>, vector<1x128xf32>
    %99 = vector.broadcast %98 : vector<1x128xf32> to vector<2x128xf32>
    %100 = arith.addf %97, %99 : vector<2x128xf32>
    %cst_47 = arith.constant 0.000000e+00 : f32
    %101 = vector.broadcast %cst_47 : f32 to vector<2x128xf32>
    %102 = arith.maximumf %100, %101 : vector<2x128xf32>
    %103 = arith.truncf %102 : vector<2x128xf32> to vector<2x128xbf16>
    %c0_48 = arith.constant 0 : index
    %c0_49 = arith.constant 0 : index
    %104 = vector.load %arg14[%c0_48, %c0_49] : memref<128x128xbf16, #tpu.memory_space<vmem>>, vector<128x128xbf16>
    %cst_50 = arith.constant dense<0.000000e+00> : vector<2x128xf32>
    %105 = tpu.matmul %103, %104, %cst_50 {dimension_numbers = #tpu.dot_dimension_numbers<[1], [0], [0], [1], [0, 0, 1, 1], [], []>} : vector<2x128xbf16>, vector<128x128xbf16>, vector<2x128xf32> -> vector<2x128xf32>
    %c0_51 = arith.constant 0 : index
    %c0_52 = arith.constant 0 : index
    %106 = vector.load %arg15[%c0_51, %c0_52] : memref<1x128xf32, #tpu.memory_space<vmem>>, vector<1x128xf32>
    %107 = vector.broadcast %106 : vector<1x128xf32> to vector<2x128xf32>
    %108 = arith.addf %105, %107 : vector<2x128xf32>
    %c0_53 = arith.constant 0 : index
    %c0_54 = arith.constant 0 : index
    %109 = vector.load %arg16[%c0_53, %c0_54] : memref<2x128xf32, #tpu.memory_space<vmem>>, vector<2x128xf32>
    tpu.vector_store %arg16[%c0_53, %c0_54], %108 {strides = array<i32>} : memref<2x128xf32, #tpu.memory_space<vmem>>, vector<2x128xf32>,
    return
  }
  func.func @transform_0(%arg0: i32) -> (i32, i32) {
    %c0_i32 = arith.constant 0 : i32
    %c0_i32_0 = arith.constant 0 : i32
    return %arg0, %c0_i32 : i32, i32
  }
  func.func @transform_1(%arg0: i32) -> (i32, i32) {
    %c0_i32 = arith.constant 0 : i32
    %c0_i32_0 = arith.constant 0 : i32
    %c0_i32_1 = arith.constant 0 : i32
    return %c0_i32, %c0_i32_0 : i32, i32
  }
  func.func @transform_2(%arg0: i32) -> (i32, i32) {
    %c0_i32 = arith.constant 0 : i32
    %c0_i32_0 = arith.constant 0 : i32
    %c0_i32_1 = arith.constant 0 : i32
    return %c0_i32, %c0_i32_0 : i32, i32
  }
  func.func @transform_3(%arg0: i32) -> (i32, i32) {
    %c0_i32 = arith.constant 0 : i32
    %c0_i32_0 = arith.constant 0 : i32
    %c0_i32_1 = arith.constant 0 : i32
    return %c0_i32, %c0_i32_0 : i32, i32
  }
  func.func @transform_4(%arg0: i32) -> (i32, i32) {
    %c0_i32 = arith.constant 0 : i32
    %c0_i32_0 = arith.constant 0 : i32
    %c0_i32_1 = arith.constant 0 : i32
    return %c0_i32, %c0_i32_0 : i32, i32
  }
  func.func @transform_5(%arg0: i32) -> (i32, i32) {
    %c0_i32 = arith.constant 0 : i32
    %c0_i32_0 = arith.constant 0 : i32
    %c0_i32_1 = arith.constant 0 : i32
    return %c0_i32, %c0_i32_0 : i32, i32
  }
  func.func @transform_6(%arg0: i32) -> (i32, i32) {
    %c0_i32 = arith.constant 0 : i32
    %c0_i32_0 = arith.constant 0 : i32
    %c0_i32_1 = arith.constant 0 : i32
    return %c0_i32, %c0_i32_0 : i32, i32
  }
  func.func @transform_7(%arg0: i32) -> (i32, i32) {
    %c0_i32 = arith.constant 0 : i32
    %c0_i32_0 = arith.constant 0 : i32
    %c0_i32_1 = arith.constant 0 : i32
    return %c0_i32, %c0_i32_0 : i32, i32
  }
  func.func @transform_8(%arg0: i32) -> (i32, i32) {
    %c0_i32 = arith.constant 0 : i32
    %c0_i32_0 = arith.constant 0 : i32
    %c0_i32_1 = arith.constant 0 : i32
    return %c0_i32, %c0_i32_0 : i32, i32
  }
  func.func @transform_9(%arg0: i32) -> (i32, i32) {
    %c0_i32 = arith.constant 0 : i32
    %c0_i32_0 = arith.constant 0 : i32
    %c0_i32_1 = arith.constant 0 : i32
    return %c0_i32, %c0_i32_0 : i32, i32
  }
  func.func @transform_10(%arg0: i32) -> (i32, i32) {
    %c0_i32 = arith.constant 0 : i32
    %c0_i32_0 = arith.constant 0 : i32
    %c0_i32_1 = arith.constant 0 : i32
    return %c0_i32, %c0_i32_0 : i32, i32
  }
  func.func @transform_11(%arg0: i32) -> (i32, i32) {
    %c0_i32 = arith.constant 0 : i32
    %c0_i32_0 = arith.constant 0 : i32
    %c0_i32_1 = arith.constant 0 : i32
    return %c0_i32, %c0_i32_0 : i32, i32
  }
  func.func @transform_12(%arg0: i32) -> (i32, i32) {
    %c0_i32 = arith.constant 0 : i32
    %c0_i32_0 = arith.constant 0 : i32
    %c0_i32_1 = arith.constant 0 : i32
    return %c0_i32, %c0_i32_0 : i32, i32
  }
  func.func @transform_13(%arg0: i32) -> (i32, i32) {
    %c0_i32 = arith.constant 0 : i32
    %c0_i32_0 = arith.constant 0 : i32
    %c0_i32_1 = arith.constant 0 : i32
    return %c0_i32, %c0_i32_0 : i32, i32
  }
  func.func @transform_14(%arg0: i32) -> (i32, i32) {
    %c0_i32 = arith.constant 0 : i32
    %c0_i32_0 = arith.constant 0 : i32
    %c0_i32_1 = arith.constant 0 : i32
    return %c0_i32, %c0_i32_0 : i32, i32
  }
  func.func @transform_15(%arg0: i32) -> (i32, i32) {
    %c0_i32 = arith.constant 0 : i32
    %c0_i32_0 = arith.constant 0 : i32
    return %arg0, %c0_i32 : i32, i32
  }
}

</mosaic_0001>

<llo_original>
// kernel: tpu_custom_call.1
$region0: #{tpu_custom_call.1}
  #allocation0 [shape = 'u32[]', space=smem, size = 0x4, offset = 0x4, fixed_abs, tag = 'smem constant byte address 0x4 - core index']
  #allocation1 [shape = 'u32[144,128]{1,0:T(1,128)}', space=vmem, size = 0x12000, scoped, tag = 'internal scratch']
  %s0 = inlined_call_operand.hbm [shape: f32[2,1024], index: 0, kind: input, shape index: {}]
  %s1 = inlined_call_operand.hbm [shape: bf16[1024,512], index: 1, kind: input, shape index: {}]
  %s2 = inlined_call_operand.vmem [shape: f32[1,512], index: 2, kind: input, shape index: {}]
  %s3 = inlined_call_operand.vmem [shape: f32[1,512], index: 3, kind: input, shape index: {}]
  %s4 = inlined_call_operand.vmem [shape: f32[1,512], index: 4, kind: input, shape index: {}]
  %s5 = inlined_call_operand.hbm [shape: bf16[512,256], index: 5, kind: input, shape index: {}]
  %s6 = inlined_call_operand.vmem [shape: f32[1,256], index: 6, kind: input, shape index: {}]
  %s7 = inlined_call_operand.vmem [shape: f32[1,256], index: 7, kind: input, shape index: {}]
  %s8 = inlined_call_operand.vmem [shape: f32[1,256], index: 8, kind: input, shape index: {}]
  %s9 = inlined_call_operand.hbm [shape: bf16[256,128], index: 9, kind: input, shape index: {}]
  %s10 = inlined_call_operand.vmem [shape: f32[1,128], index: 10, kind: input, shape index: {}]
  %s11 = inlined_call_operand.vmem [shape: f32[1,128], index: 11, kind: input, shape index: {}]
  %s12 = inlined_call_operand.vmem [shape: f32[1,128], index: 12, kind: input, shape index: {}]
  %s13 = inlined_call_operand.hbm [shape: bf16[128,128], index: 13, kind: input, shape index: {}]
  %s14 = inlined_call_operand.vmem [shape: f32[1,128], index: 14, kind: input, shape index: {}]
  %s15 = inlined_call_operand.hbm [shape: f32[2,128], index: 15, kind: output, shape index: {}]
  %s16 = sld [smem:[#allocation0]]
  $region90: #{tpu_custom_call.1} parent=0
    _
  %s18 = ssub.s32 1, %s16
  %s19 = scalar_select 0, %s18, %s16
  $region1: #{tpu_custom_call.1} parent=0
    #allocation2 [shape = 'u8[8192]{0}', space=vmem, size = 0x2000, scoped, tag = 'input window, operand 0, single buffered']
    #allocation3 [shape = 's32[1]{0}', space=sflag, size = 0x4, scoped, tag = 'scoped memory for tpu_custom_call.1']
    #allocation4 [shape = 's32[1]{0}', space=sflag, size = 0x4, scoped, tag = 'scoped memory for tpu_custom_call.1']
    #allocation5 [shape = 'u8[1048576]{0}', space=vmem, size = 0x100000, scoped, tag = 'input window, operand 1, single buffered']
    #allocation6 [shape = 's32[1]{0}', space=sflag, size = 0x4, scoped, tag = 'scoped memory for tpu_custom_call.1']
    #allocation7 [shape = 'u8[262144]{0}', space=vmem, size = 0x40000, scoped, tag = 'input window, operand 5, single buffered']
    #allocation8 [shape = 'u8[65536]{0}', space=vmem, size = 0x10000, scoped, tag = 'input window, operand 9, single buffered']
    #allocation9 [shape = 's32[1]{0}', space=sflag, size = 0x4, scoped, tag = 'scoped memory for tpu_custom_call.1']
    #allocation10 [shape = 'u8[32768]{0}', space=vmem, size = 0x8000, scoped, tag = 'input window, operand 13, single buffered']
    #allocation11 [shape = 'u8[1024]{0}', space=vmem, size = 0x400, scoped, tag = 'output window, operand 0, single buffered']
    %20 = vsyncpa [#allocation3], 0
    %21 = vsyncpa [#allocation6], 0
    %22 = vsyncpa [#allocation9], 0
    %23 = vsyncpa [#allocation4], 0
    // Predicated region
    $region2: #{tpu_custom_call.1} parent=1 // pred_check
      _
    $region3: #{tpu_custom_call.1} parent=1 // pred_check_branch
      %25 = sbr.rel (0) target = $region5
    $region4: #{tpu_custom_call.1} parent=1 // pred_region
      %s27 = ssub.s32 256, 256
      %28 = vsyncadd [#allocation3], %s27
      %s30 = sshll.u32 [#allocation2], 4
      %s31 = int_to_ptr.vmem [resolvable:$true] %s30
      %33 = dma.hbm_to_vmem [thread:$0]  %s0, 256, %s31, [#allocation3]
    $region5: #{tpu_custom_call.1} parent=1 // pred_fallthru
      _
    // Predicated region
    $region6: #{tpu_custom_call.1} parent=1 // pred_check
      _
    $region7: #{tpu_custom_call.1} parent=1 // pred_check_branch
      %35 = sbr.rel (0) target = $region9
    $region8: #{tpu_custom_call.1} parent=1 // pred_region
      %s37 = ssub.s32 32768, 32768
      %38 = vsyncadd [#allocation6], %s37
      %s39 = sshll.u32 [#allocation5], 4
      %s40 = int_to_ptr.vmem [resolvable:$true] %s39
      %45 = dma.hbm_to_vmem [thread:$0]  %s1, 32768, %s40, [#allocation6], 256, 256, 16
    $region9: #{tpu_custom_call.1} parent=1 // pred_fallthru
      _
    // Predicated region
    $region10: #{tpu_custom_call.1} parent=1 // pred_check
      _
    $region11: #{tpu_custom_call.1} parent=1 // pred_check_branch
      %47 = sbr.rel (0) target = $region13
    $region12: #{tpu_custom_call.1} parent=1 // pred_region
      _
    $region13: #{tpu_custom_call.1} parent=1 // pred_fallthru
      _
    // Predicated region
    $region14: #{tpu_custom_call.1} parent=1 // pred_check
      _
    $region15: #{tpu_custom_call.1} parent=1 // pred_check_branch
      %49 = sbr.rel (0) target = $region17
    $region16: #{tpu_custom_call.1} parent=1 // pred_region
      _
    $region17: #{tpu_custom_call.1} parent=1 // pred_fallthru
      _
    // Predicated region
    $region18: #{tpu_custom_call.1} parent=1 // pred_check
      _
    $region19: #{tpu_custom_call.1} parent=1 // pred_check_branch
      %51 = sbr.rel (0) target = $region21
    $region20: #{tpu_custom_call.1} parent=1 // pred_region
      _
    $region21: #{tpu_custom_call.1} parent=1 // pred_fallthru
      _
    // Predicated region
    $region22: #{tpu_custom_call.1} parent=1 // pred_check
      _
    $region23: #{tpu_custom_call.1} parent=1 // pred_check_branch
      %53 = sbr.rel (0) target = $region25
    $region24: #{tpu_custom_call.1} parent=1 // pred_region
      %s55 = ssub.s32 8192, 8192
      %56 = vsyncadd [#allocation6], %s55
      %s57 = sshll.u32 [#allocation7], 4
      %s58 = int_to_ptr.vmem [resolvable:$true] %s57
      %63 = dma.hbm_to_vmem [thread:$0]  %s5, 8192, %s58, [#allocation6], 128, 128, 8
    $region25: #{tpu_custom_call.1} parent=1 // pred_fallthru
      _
    // Predicated region
    $region26: #{tpu_custom_call.1} parent=1 // pred_check
      _
    $region27: #{tpu_custom_call.1} parent=1 // pred_check_branch
      %65 = sbr.rel (0) target = $region29
    $region28: #{tpu_custom_call.1} parent=1 // pred_region
      _
    $region29: #{tpu_custom_call.1} parent=1 // pred_fallthru
      _
    // Predicated region
    $region30: #{tpu_custom_call.1} parent=1 // pred_check
      _
    $region31: #{tpu_custom_call.1} parent=1 // pred_check_branch
      %67 = sbr.rel (0) target = $region33
    $region32: #{tpu_custom_call.1} parent=1 // pred_region
      _
    $region33: #{tpu_custom_call.1} parent=1 // pred_fallthru
      _
    // Predicated region
    $region34: #{tpu_custom_call.1} parent=1 // pred_check
      _
    $region35: #{tpu_custom_call.1} parent=1 // pred_check_branch
      %69 = sbr.rel (0) target = $region37
    $region36: #{tpu_custom_call.1} parent=1 // pred_region
      _
    $region37: #{tpu_custom_call.1} parent=1 // pred_fallthru
      _
    // Predicated region
    $region38: #{tpu_custom_call.1} parent=1 // pred_check
      _
    $region39: #{tpu_custom_call.1} parent=1 // pred_check_branch
      %71 = sbr.rel (0) target = $region41
    $region40: #{tpu_custom_call.1} parent=1 // pred_region
      %s73 = ssub.s32 2048, 2048
      %74 = vsyncadd [#allocation9], %s73
      %s75 = sshll.u32 [#allocation8], 4
      %s76 = int_to_ptr.vmem [resolvable:$true] %s75
      %81 = dma.hbm_to_vmem [thread:$0]  %s9, 2048, %s76, [#allocation9], 64, 64, 4
    $region41: #{tpu_custom_call.1} parent=1 // pred_fallthru
      _
    // Predicated region
    $region42: #{tpu_custom_call.1} parent=1 // pred_check
      _
    $region43: #{tpu_custom_call.1} parent=1 // pred_check_branch
      %83 = sbr.rel (0) target = $region45
    $region44: #{tpu_custom_call.1} parent=1 // pred_region
      _
    $region45: #{tpu_custom_call.1} parent=1 // pred_fallthru
      _
    // Predicated region
    $region46: #{tpu_custom_call.1} parent=1 // pred_check
      _
    $region47: #{tpu_custom_call.1} parent=1 // pred_check_branch
      %85 = sbr.rel (0) target = $region49
    $region48: #{tpu_custom_call.1} parent=1 // pred_region
      _
    $region49: #{tpu_custom_call.1} parent=1 // pred_fallthru
      _
    // Predicated region
    $region50: #{tpu_custom_call.1} parent=1 // pred_check
      _
    $region51: #{tpu_custom_call.1} parent=1 // pred_check_branch
      %87 = sbr.rel (0) target = $region53
    $region52: #{tpu_custom_call.1} parent=1 // pred_region
      _
    $region53: #{tpu_custom_call.1} parent=1 // pred_fallthru
      _
    // Predicated region
    $region54: #{tpu_custom_call.1} parent=1 // pred_check
      _
    $region55: #{tpu_custom_call.1} parent=1 // pred_check_branch
      %89 = sbr.rel (0) target = $region57
    $region56: #{tpu_custom_call.1} parent=1 // pred_region
      %s91 = ssub.s32 1024, 1024
      %92 = vsyncadd [#allocation9], %s91
      %s93 = sshll.u32 [#allocation10], 4
      %s94 = int_to_ptr.vmem [resolvable:$true] %s93
      %99 = dma.hbm_to_vmem [thread:$0]  %s13, 1024, %s94, [#allocation9], 64, 64, 4
    $region57: #{tpu_custom_call.1} parent=1 // pred_fallthru
      _
    // Predicated region
    $region58: #{tpu_custom_call.1} parent=1 // pred_check
      _
    $region59: #{tpu_custom_call.1} parent=1 // pred_check_branch
      %101 = sbr.rel (0) target = $region61
    $region60: #{tpu_custom_call.1} parent=1 // pred_region
      _
    $region61: #{tpu_custom_call.1} parent=1 // pred_fallthru
      _
    // Predicated region
    $region62: #{tpu_custom_call.1} parent=1 // pred_check
      _
    $region63: #{tpu_custom_call.1} parent=1 // pred_check_branch
      %103 = sbr.rel (0) target = $region65
    $region64: #{tpu_custom_call.1} parent=1 // pred_region
      %104 = dma.done [#allocation3], 256
    $region65: #{tpu_custom_call.1} parent=1 // pred_fallthru
      _
    // Predicated region
    $region66: #{tpu_custom_call.1} parent=1 // pred_check
      _
    $region67: #{tpu_custom_call.1} parent=1 // pred_check_branch
      %106 = sbr.rel (0) target = $region69
    $region68: #{tpu_custom_call.1} parent=1 // pred_region
      %107 = dma.done [#allocation6], 32768
    $region69: #{tpu_custom_call.1} parent=1 // pred_fallthru
      _
    // Predicated region
    $region70: #{tpu_custom_call.1} parent=1 // pred_check
      _
    $region71: #{tpu_custom_call.1} parent=1 // pred_check_branch
      %109 = sbr.rel (0) target = $region73
    $region72: #{tpu_custom_call.1} parent=1 // pred_region
      %110 = dma.done [#allocation6], 8192
    $region73: #{tpu_custom_call.1} parent=1 // pred_fallthru
      _
    // Predicated region
    $region74: #{tpu_custom_call.1} parent=1 // pred_check
      _
    $region75: #{tpu_custom_call.1} parent=1 // pred_check_branch
      %112 = sbr.rel (0) target = $region77
    $region76: #{tpu_custom_call.1} parent=1 // pred_region
      %113 = dma.done [#allocation9], 2048
    $region77: #{tpu_custom_call.1} parent=1 // pred_fallthru
      _
    // Predicated region
    $region78: #{tpu_custom_call.1} parent=1 // pred_check
      _
    $region79: #{tpu_custom_call.1} parent=1 // pred_check_branch
      %115 = sbr.rel (0) target = $region81
    $region80: #{tpu_custom_call.1} parent=1 // pred_region
      %116 = dma.done [#allocation9], 1024
    $region81: #{tpu_custom_call.1} parent=1 // pred_fallthru
      _
    %v118 = vld [vmem:[#allocation2] sm:$0xff]
    %v119 = vld [vmem:[#allocation2 + $0x8] sm:$0xff]
    %v122 = vcombine.high %v118, %v118
    %v124 = vunpack.c.l.s4 1983009808
    %v125 = vunpack.c.0.s8 %v124
    %v126 = vlaneseq
    %v127 = vshrl.u32 %v126, 7
    %v128 = vsub.s32 %v125, %v127
    %v129 = vrot.slane %v118, %v128
    %v131 = vunpack.c.l.s4 1983009808
    %v132 = vunpack.c.0.s8 %v131
    %v133 = vlaneseq
    %v134 = vshrl.u32 %v133, 7
    %v135 = vsub.s32 %v132, %v134
    %v136 = vrot.slane %v122, %v135
    %v137 = vcombine.high %v129, %v129
    %v138 = vcombine.high %v136, %v136
    %v139 = vcombine.high %v119, %v119
    %v141 = vunpack.c.l.s4 1983009808
    %v142 = vunpack.c.0.s8 %v141
    %v143 = vlaneseq
    %v144 = vshrl.u32 %v143, 7
    %v145 = vsub.s32 %v142, %v144
    %v146 = vrot.slane %v119, %v145
    %v148 = vunpack.c.l.s4 1983009808
    %v149 = vunpack.c.0.s8 %v148
    %v150 = vlaneseq
    %v151 = vshrl.u32 %v150, 7
    %v152 = vsub.s32 %v149, %v151
    %v153 = vrot.slane %v139, %v152
    %v154 = vcombine.high %v146, %v146
    %v155 = vcombine.high %v153, %v153
    %v164 = vpack.c.bf16 %v129, %v129
    %v165 = vpack.c.bf16 %v137, %v137
    %v166 = vpack.c.bf16 %v136, %v136
    %v167 = vpack.c.bf16 %v138, %v138
    %v168 = vpack.c.bf16 %v146, %v146
    %v169 = vpack.c.bf16 %v154, %v154
    %v170 = vpack.c.bf16 %v153, %v153
    %v171 = vpack.c.bf16 %v155, %v155
    %v172 = vld [vmem:[#allocation5] sm:$0xff]
    %v173 = vld [vmem:[#allocation5 + $0x8] sm:$0xff]
    %v174 = vld [vmem:[#allocation5 + $0x10] sm:$0xff]
    %v175 = vld [vmem:[#allocation5 + $0x18] sm:$0xff]
    %v176 = vld [vmem:[#allocation5 + $0x20] sm:$0xff]
    %v177 = vld [vmem:[#allocation5 + $0x28] sm:$0xff]
    %v178 = vld [vmem:[#allocation5 + $0x30] sm:$0xff]
    %v179 = vld [vmem:[#allocation5 + $0x38] sm:$0xff]
    %v180 = vld [vmem:[#allocation5 + $0x40] sm:$0xff]
    %v181 = vld [vmem:[#allocation5 + $0x48] sm:$0xff]
    %v182 = vld [vmem:[#allocation5 + $0x50] sm:$0xff]
    %v183 = vld [vmem:[#allocation5 + $0x58] sm:$0xff]
    %v184 = vld [vmem:[#allocation5 + $0x60] sm:$0xff]
    %v185 = vld [vmem:[#allocation5 + $0x68] sm:$0xff]
    %v186 = vld [vmem:[#allocation5 + $0x70] sm:$0xff]
    %v187 = vld [vmem:[#allocation5 + $0x78] sm:$0xff]
    %v188 = vld [vmem:[#allocation5 + $0x80] sm:$0xff]
    %v189 = vld [vmem:[#allocation5 + $0x88] sm:$0xff]
    %v190 = vld [vmem:[#allocation5 + $0x90] sm:$0xff]
    %v191 = vld [vmem:[#allocation5 + $0x98] sm:$0xff]
    %v192 = vld [vmem:[#allocation5 + $0xa0] sm:$0xff]
    %v193 = vld [vmem:[#allocation5 + $0xa8] sm:$0xff]
    %v194 = vld [vmem:[#allocation5 + $0xb0] sm:$0xff]
    %v195 = vld [vmem:[#allocation5 + $0xb8] sm:$0xff]
    %v196 = vld [vmem:[#allocation5 + $0xc0] sm:$0xff]
    %v197 = vld [vmem:[#allocation5 + $0xc8] sm:$0xff]
    %v198 = vld [vmem:[#allocation5 + $0xd0] sm:$0xff]
    %v199 = vld [vmem:[#allocation5 + $0xd8] sm:$0xff]
    %v200 = vld [vmem:[#allocation5 + $0xe0] sm:$0xff]
    %v201 = vld [vmem:[#allocation5 + $0xe8] sm:$0xff]
    %v202 = vld [vmem:[#allocation5 + $0xf0] sm:$0xff]
    %v203 = vld [vmem:[#allocation5 + $0xf8] sm:$0xff]
    %v204 = vld [vmem:[#allocation5 + $0x100] sm:$0xff]
    %v205 = vld [vmem:[#allocation5 + $0x108] sm:$0xff]
    %v206 = vld [vmem:[#allocation5 + $0x110] sm:$0xff]
    %v207 = vld [vmem:[#allocation5 + $0x118] sm:$0xff]
    %v208 = vld [vmem:[#allocation5 + $0x120] sm:$0xff]
    %v209 = vld [vmem:[#allocation5 + $0x128] sm:$0xff]
    %v210 = vld [vmem:[#allocation5 + $0x130] sm:$0xff]
    %v211 = vld [vmem:[#allocation5 + $0x138] sm:$0xff]
    %v212 = vld [vmem:[#allocation5 + $0x140] sm:$0xff]
    %v213 = vld [vmem:[#allocation5 + $0x148] sm:$0xff]
    %v214 = vld [vmem:[#allocation5 + $0x150] sm:$0xff]
    %v215 = vld [vmem:[#allocation5 + $0x158] sm:$0xff]
    %v216 = vld [vmem:[#allocation5 + $0x160] sm:$0xff]
    %v217 = vld [vmem:[#allocation5 + $0x168] sm:$0xff]
    %v218 = vld [vmem:[#allocation5 + $0x170] sm:$0xff]
    %v219 = vld [vmem:[#allocation5 + $0x178] sm:$0xff]
    %v220 = vld [vmem:[#allocation5 + $0x180] sm:$0xff]
    %v221 = vld [vmem:[#allocation5 + $0x188] sm:$0xff]
    %v222 = vld [vmem:[#allocation5 + $0x190] sm:$0xff]
    %v223 = vld [vmem:[#allocation5 + $0x198] sm:$0xff]
    %v224 = vld [vmem:[#allocation5 + $0x1a0] sm:$0xff]
    %v225 = vld [vmem:[#allocation5 + $0x1a8] sm:$0xff]
    %v226 = vld [vmem:[#allocation5 + $0x1b0] sm:$0xff]
    %v227 = vld [vmem:[#allocation5 + $0x1b8] sm:$0xff]
    %v228 = vld [vmem:[#allocation5 + $0x1c0] sm:$0xff]
    %v229 = vld [vmem:[#allocation5 + $0x1c8] sm:$0xff]
    %v230 = vld [vmem:[#allocation5 + $0x1d0] sm:$0xff]
    %v231 = vld [vmem:[#allocation5 + $0x1d8] sm:$0xff]
    %v232 = vld [vmem:[#allocation5 + $0x1e0] sm:$0xff]
    %v233 = vld [vmem:[#allocation5 + $0x1e8] sm:$0xff]
    %v234 = vld [vmem:[#allocation5 + $0x1f0] sm:$0xff]
    %v235 = vld [vmem:[#allocation5 + $0x1f8] sm:$0xff]
    %v236 = vld [vmem:[#allocation5 + $0x200] sm:$0xff]
    %v237 = vld [vmem:[#allocation5 + $0x208] sm:$0xff]
    %v238 = vld [vmem:[#allocation5 + $0x210] sm:$0xff]
    %v239 = vld [vmem:[#allocation5 + $0x218] sm:$0xff]
    %v240 = vld [vmem:[#allocation5 + $0x220] sm:$0xff]
    %v241 = vld [vmem:[#allocation5 + $0x228] sm:$0xff]
    %v242 = vld [vmem:[#allocation5 + $0x230] sm:$0xff]
    %v243 = vld [vmem:[#allocation5 + $0x238] sm:$0xff]
    %v244 = vld [vmem:[#allocation5 + $0x240] sm:$0xff]
    %v245 = vld [vmem:[#allocation5 + $0x248] sm:$0xff]
    %v246 = vld [vmem:[#allocation5 + $0x250] sm:$0xff]
    %v247 = vld [vmem:[#allocation5 + $0x258] sm:$0xff]
    %v248 = vld [vmem:[#allocation5 + $0x260] sm:$0xff]
    %v249 = vld [vmem:[#allocation5 + $0x268] sm:$0xff]
    %v250 = vld [vmem:[#allocation5 + $0x270] sm:$0xff]
    %v251 = vld [vmem:[#allocation5 + $0x278] sm:$0xff]
    %v252 = vld [vmem:[#allocation5 + $0x280] sm:$0xff]
    %v253 = vld [vmem:[#allocation5 + $0x288] sm:$0xff]
    %v254 = vld [vmem:[#allocation5 + $0x290] sm:$0xff]
    %v255 = vld [vmem:[#allocation5 + $0x298] sm:$0xff]
    %v256 = vld [vmem:[#allocation5 + $0x2a0] sm:$0xff]
    %v257 = vld [vmem:[#allocation5 + $0x2a8] sm:$0xff]
    %v258 = vld [vmem:[#allocation5 + $0x2b0] sm:$0xff]
    %v259 = vld [vmem:[#allocation5 + $0x2b8] sm:$0xff]
    %v260 = vld [vmem:[#allocation5 + $0x2c0] sm:$0xff]
    %v261 = vld [vmem:[#allocation5 + $0x2c8] sm:$0xff]
    %v262 = vld [vmem:[#allocation5 + $0x2d0] sm:$0xff]
    %v263 = vld [vmem:[#allocation5 + $0x2d8] sm:$0xff]
    %v264 = vld [vmem:[#allocation5 + $0x2e0] sm:$0xff]
    %v265 = vld [vmem:[#allocation5 + $0x2e8] sm:$0xff]
    %v266 = vld [vmem:[#allocation5 + $0x2f0] sm:$0xff]
    %v267 = vld [vmem:[#allocation5 + $0x2f8] sm:$0xff]
    %v268 = vld [vmem:[#allocation5 + $0x300] sm:$0xff]
    %v269 = vld [vmem:[#allocation5 + $0x308] sm:$0xff]
    %v270 = vld [vmem:[#allocation5 + $0x310] sm:$0xff]
    %v271 = vld [vmem:[#allocation5 + $0x318] sm:$0xff]
    %v272 = vld [vmem:[#allocation5 + $0x320] sm:$0xff]
    %v273 = vld [vmem:[#allocation5 + $0x328] sm:$0xff]
    %v274 = vld [vmem:[#allocation5 + $0x330] sm:$0xff]
    %v275 = vld [vmem:[#allocation5 + $0x338] sm:$0xff]
    %v276 = vld [vmem:[#allocation5 + $0x340] sm:$0xff]
    %v277 = vld [vmem:[#allocation5 + $0x348] sm:$0xff]
    %v278 = vld [vmem:[#allocation5 + $0x350] sm:$0xff]
    %v279 = vld [vmem:[#allocation5 + $0x358] sm:$0xff]
    %v280 = vld [vmem:[#allocation5 + $0x360] sm:$0xff]
    %v281 = vld [vmem:[#allocation5 + $0x368] sm:$0xff]
    %v282 = vld [vmem:[#allocation5 + $0x370] sm:$0xff]
    %v283 = vld [vmem:[#allocation5 + $0x378] sm:$0xff]
    %v284 = vld [vmem:[#allocation5 + $0x380] sm:$0xff]
    %v285 = vld [vmem:[#allocation5 + $0x388] sm:$0xff]
    %v286 = vld [vmem:[#allocation5 + $0x390] sm:$0xff]
    %v287 = vld [vmem:[#allocation5 + $0x398] sm:$0xff]
    %v288 = vld [vmem:[#allocation5 + $0x3a0] sm:$0xff]
    %v289 = vld [vmem:[#allocation5 + $0x3a8] sm:$0xff]
    %v290 = vld [vmem:[#allocation5 + $0x3b0] sm:$0xff]
    %v291 = vld [vmem:[#allocation5 + $0x3b8] sm:$0xff]
    %v292 = vld [vmem:[#allocation5 + $0x3c0] sm:$0xff]
    %v293 = vld [vmem:[#allocation5 + $0x3c8] sm:$0xff]
    %v294 = vld [vmem:[#allocation5 + $0x3d0] sm:$0xff]
    %v295 = vld [vmem:[#allocation5 + $0x3d8] sm:$0xff]
    %v296 = vld [vmem:[#allocation5 + $0x3e0] sm:$0xff]
    %v297 = vld [vmem:[#allocation5 + $0x3e8] sm:$0xff]
    %v298 = vld [vmem:[#allocation5 + $0x3f0] sm:$0xff]
    %v299 = vld [vmem:[#allocation5 + $0x3f8] sm:$0xff]
    %v300 = vld [vmem:[#allocation5 + $0x400] sm:$0xff]
    %v301 = vld [vmem:[#allocation5 + $0x408] sm:$0xff]
    %v302 = vld [vmem:[#allocation5 + $0x410] sm:$0xff]
    %v303 = vld [vmem:[#allocation5 + $0x418] sm:$0xff]
    %v304 = vld [vmem:[#allocation5 + $0x420] sm:$0xff]
    %v305 = vld [vmem:[#allocation5 + $0x428] sm:$0xff]
    %v306 = vld [vmem:[#allocation5 + $0x430] sm:$0xff]
    %v307 = vld [vmem:[#allocation5 + $0x438] sm:$0xff]
    %v308 = vld [vmem:[#allocation5 + $0x440] sm:$0xff]
    %v309 = vld [vmem:[#allocation5 + $0x448] sm:$0xff]
    %v310 = vld [vmem:[#allocation5 + $0x450] sm:$0xff]
    %v311 = vld [vmem:[#allocation5 + $0x458] sm:$0xff]
    %v312 = vld [vmem:[#allocation5 + $0x460] sm:$0xff]
    %v313 = vld [vmem:[#allocation5 + $0x468] sm:$0xff]
    %v314 = vld [vmem:[#allocation5 + $0x470] sm:$0xff]
    %v315 = vld [vmem:[#allocation5 + $0x478] sm:$0xff]
    %v316 = vld [vmem:[#allocation5 + $0x480] sm:$0xff]
    %v317 = vld [vmem:[#allocation5 + $0x488] sm:$0xff]
    %v318 = vld [vmem:[#allocation5 + $0x490] sm:$0xff]
    %v319 = vld [vmem:[#allocation5 + $0x498] sm:$0xff]
    %v320 = vld [vmem:[#allocation5 + $0x4a0] sm:$0xff]
    %v321 = vld [vmem:[#allocation5 + $0x4a8] sm:$0xff]
    %v322 = vld [vmem:[#allocation5 + $0x4b0] sm:$0xff]
    %v323 = vld [vmem:[#allocation5 + $0x4b8] sm:$0xff]
    %v324 = vld [vmem:[#allocation5 + $0x4c0] sm:$0xff]
    %v325 = vld [vmem:[#allocation5 + $0x4c8] sm:$0xff]
    %v326 = vld [vmem:[#allocation5 + $0x4d0] sm:$0xff]
    %v327 = vld [vmem:[#allocation5 + $0x4d8] sm:$0xff]
    %v328 = vld [vmem:[#allocation5 + $0x4e0] sm:$0xff]
    %v329 = vld [vmem:[#allocation5 + $0x4e8] sm:$0xff]
    %v330 = vld [vmem:[#allocation5 + $0x4f0] sm:$0xff]
    %v331 = vld [vmem:[#allocation5 + $0x4f8] sm:$0xff]
    %v332 = vld [vmem:[#allocation5 + $0x500] sm:$0xff]
    %v333 = vld [vmem:[#allocation5 + $0x508] sm:$0xff]
    %v334 = vld [vmem:[#allocation5 + $0x510] sm:$0xff]
    %v335 = vld [vmem:[#allocation5 + $0x518] sm:$0xff]
    %v336 = vld [vmem:[#allocation5 + $0x520] sm:$0xff]
    %v337 = vld [vmem:[#allocation5 + $0x528] sm:$0xff]
    %v338 = vld [vmem:[#allocation5 + $0x530] sm:$0xff]
    %v339 = vld [vmem:[#allocation5 + $0x538] sm:$0xff]
    %v340 = vld [vmem:[#allocation5 + $0x540] sm:$0xff]
    %v341 = vld [vmem:[#allocation5 + $0x548] sm:$0xff]
    %v342 = vld [vmem:[#allocation5 + $0x550] sm:$0xff]
    %v343 = vld [vmem:[#allocation5 + $0x558] sm:$0xff]
    %v344 = vld [vmem:[#allocation5 + $0x560] sm:$0xff]
    %v345 = vld [vmem:[#allocation5 + $0x568] sm:$0xff]
    %v346 = vld [vmem:[#allocation5 + $0x570] sm:$0xff]
    %v347 = vld [vmem:[#allocation5 + $0x578] sm:$0xff]
    %v348 = vld [vmem:[#allocation5 + $0x580] sm:$0xff]
    %v349 = vld [vmem:[#allocation5 + $0x588] sm:$0xff]
    %v350 = vld [vmem:[#allocation5 + $0x590] sm:$0xff]
    %v351 = vld [vmem:[#allocation5 + $0x598] sm:$0xff]
    %v352 = vld [vmem:[#allocation5 + $0x5a0] sm:$0xff]
    %v353 = vld [vmem:[#allocation5 + $0x5a8] sm:$0xff]
    %v354 = vld [vmem:[#allocation5 + $0x5b0] sm:$0xff]
    %v355 = vld [vmem:[#allocation5 + $0x5b8] sm:$0xff]
    %v356 = vld [vmem:[#allocation5 + $0x5c0] sm:$0xff]
    %v357 = vld [vmem:[#allocation5 + $0x5c8] sm:$0xff]
    %v358 = vld [vmem:[#allocation5 + $0x5d0] sm:$0xff]
    %v359 = vld [vmem:[#allocation5 + $0x5d8] sm:$0xff]
    %v360 = vld [vmem:[#allocation5 + $0x5e0] sm:$0xff]
    %v361 = vld [vmem:[#allocation5 + $0x5e8] sm:$0xff]
    %v362 = vld [vmem:[#allocation5 + $0x5f0] sm:$0xff]
    %v363 = vld [vmem:[#allocation5 + $0x5f8] sm:$0xff]
    %v364 = vld [vmem:[#allocation5 + $0x600] sm:$0xff]
    %v365 = vld [vmem:[#allocation5 + $0x608] sm:$0xff]
    %v366 = vld [vmem:[#allocation5 + $0x610] sm:$0xff]
    %v367 = vld [vmem:[#allocation5 + $0x618] sm:$0xff]
    %v368 = vld [vmem:[#allocation5 + $0x620] sm:$0xff]
    %v369 = vld [vmem:[#allocation5 + $0x628] sm:$0xff]
    %v370 = vld [vmem:[#allocation5 + $0x630] sm:$0xff]
    %v371 = vld [vmem:[#allocation5 + $0x638] sm:$0xff]
    %v372 = vld [vmem:[#allocation5 + $0x640] sm:$0xff]
    %v373 = vld [vmem:[#allocation5 + $0x648] sm:$0xff]
    %v374 = vld [vmem:[#allocation5 + $0x650] sm:$0xff]
    %v375 = vld [vmem:[#allocation5 + $0x658] sm:$0xff]
    %v376 = vld [vmem:[#allocation5 + $0x660] sm:$0xff]
    %v377 = vld [vmem:[#allocation5 + $0x668] sm:$0xff]
    %v378 = vld [vmem:[#allocation5 + $0x670] sm:$0xff]
    %v379 = vld [vmem:[#allocation5 + $0x678] sm:$0xff]
    %v380 = vld [vmem:[#allocation5 + $0x680] sm:$0xff]
    %v381 = vld [vmem:[#allocation5 + $0x688] sm:$0xff]
    %v382 = vld [vmem:[#allocation5 + $0x690] sm:$0xff]
    %v383 = vld [vmem:[#allocation5 + $0x698] sm:$0xff]
    %v384 = vld [vmem:[#allocation5 + $0x6a0] sm:$0xff]
    %v385 = vld [vmem:[#allocation5 + $0x6a8] sm:$0xff]
    %v386 = vld [vmem:[#allocation5 + $0x6b0] sm:$0xff]
    %v387 = vld [vmem:[#allocation5 + $0x6b8] sm:$0xff]
    %v388 = vld [vmem:[#allocation5 + $0x6c0] sm:$0xff]
    %v389 = vld [vmem:[#allocation5 + $0x6c8] sm:$0xff]
    %v390 = vld [vmem:[#allocation5 + $0x6d0] sm:$0xff]
    %v391 = vld [vmem:[#allocation5 + $0x6d8] sm:$0xff]
    %v392 = vld [vmem:[#allocation5 + $0x6e0] sm:$0xff]
    %v393 = vld [vmem:[#allocation5 + $0x6e8] sm:$0xff]
    %v394 = vld [vmem:[#allocation5 + $0x6f0] sm:$0xff]
    %v395 = vld [vmem:[#allocation5 + $0x6f8] sm:$0xff]
    %v396 = vld [vmem:[#allocation5 + $0x700] sm:$0xff]
    %v397 = vld [vmem:[#allocation5 + $0x708] sm:$0xff]
    %v398 = vld [vmem:[#allocation5 + $0x710] sm:$0xff]
    %v399 = vld [vmem:[#allocation5 + $0x718] sm:$0xff]
    %v400 = vld [vmem:[#allocation5 + $0x720] sm:$0xff]
    %v401 = vld [vmem:[#allocation5 + $0x728] sm:$0xff]
    %v402 = vld [vmem:[#allocation5 + $0x730] sm:$0xff]
    %v403 = vld [vmem:[#allocation5 + $0x738] sm:$0xff]
    %v404 = vld [vmem:[#allocation5 + $0x740] sm:$0xff]
    %v405 = vld [vmem:[#allocation5 + $0x748] sm:$0xff]
    %v406 = vld [vmem:[#allocation5 + $0x750] sm:$0xff]
    %v407 = vld [vmem:[#allocation5 + $0x758] sm:$0xff]
    %v408 = vld [vmem:[#allocation5 + $0x760] sm:$0xff]
    %v409 = vld [vmem:[#allocation5 + $0x768] sm:$0xff]
    %v410 = vld [vmem:[#allocation5 + $0x770] sm:$0xff]
    %v411 = vld [vmem:[#allocation5 + $0x778] sm:$0xff]
    %v412 = vld [vmem:[#allocation5 + $0x780] sm:$0xff]
    %v413 = vld [vmem:[#allocation5 + $0x788] sm:$0xff]
    %v414 = vld [vmem:[#allocation5 + $0x790] sm:$0xff]
    %v415 = vld [vmem:[#allocation5 + $0x798] sm:$0xff]
    %v416 = vld [vmem:[#allocation5 + $0x7a0] sm:$0xff]
    %v417 = vld [vmem:[#allocation5 + $0x7a8] sm:$0xff]
    %v418 = vld [vmem:[#allocation5 + $0x7b0] sm:$0xff]
    %v419 = vld [vmem:[#allocation5 + $0x7b8] sm:$0xff]
    %v420 = vld [vmem:[#allocation5 + $0x7c0] sm:$0xff]
    %v421 = vld [vmem:[#allocation5 + $0x7c8] sm:$0xff]
    %v422 = vld [vmem:[#allocation5 + $0x7d0] sm:$0xff]
    %v423 = vld [vmem:[#allocation5 + $0x7d8] sm:$0xff]
    %v424 = vld [vmem:[#allocation5 + $0x7e0] sm:$0xff]
    %v425 = vld [vmem:[#allocation5 + $0x7e8] sm:$0xff]
    %v426 = vld [vmem:[#allocation5 + $0x7f0] sm:$0xff]
    %v427 = vld [vmem:[#allocation5 + $0x7f8] sm:$0xff]
    %v428 = vld [vmem:[%s2] sm:$0xf]
    %v430 = vlaneseq
    %v431 = vshrl.u32 %v430, 7
    %v432 = vsub.s32 0, %v431
    %v433 = vrot.slane %v428, %v432
    %v434 = vlaneseq
    %v435 = vshrl.u32 %v434, 7
    %v436 = vsub.s32 1, %v435
    %v437 = vrot.slane %v428, %v436
    %v438 = vlaneseq
    %v439 = vshrl.u32 %v438, 7
    %v440 = vsub.s32 2, %v439
    %v441 = vrot.slane %v428, %v440
    %v442 = vlaneseq
    %v443 = vshrl.u32 %v442, 7
    %v444 = vsub.s32 3, %v443
    %v445 = vrot.slane %v428, %v444
    %v706 = vunpack.c.l.b16 %v172
    %v707 = vunpack.c.h.b16 %v172
    %v708 = vunpack.c.l.b16 %v173
    %v709 = vunpack.c.h.b16 %v173
    %v710 = vunpack.c.l.b16 %v174
    %v711 = vunpack.c.h.b16 %v174
    %v712 = vunpack.c.l.b16 %v175
    %v713 = vunpack.c.h.b16 %v175
    %v714 = vunpack.c.l.b16 %v176
    %v715 = vunpack.c.h.b16 %v176
    %v716 = vunpack.c.l.b16 %v177
    %v717 = vunpack.c.h.b16 %v177
    %v718 = vunpack.c.l.b16 %v178
    %v719 = vunpack.c.h.b16 %v178
    %v720 = vunpack.c.l.b16 %v179
    %v721 = vunpack.c.h.b16 %v179
    %v722 = vunpack.c.l.b16 %v180
    %v723 = vunpack.c.h.b16 %v180
    %v724 = vunpack.c.l.b16 %v181
    %v725 = vunpack.c.h.b16 %v181
    %v726 = vunpack.c.l.b16 %v182
    %v727 = vunpack.c.h.b16 %v182
    %v728 = vunpack.c.l.b16 %v183
    %v729 = vunpack.c.h.b16 %v183
    %v730 = vunpack.c.l.b16 %v184
    %v731 = vunpack.c.h.b16 %v184
    %v732 = vunpack.c.l.b16 %v185
    %v733 = vunpack.c.h.b16 %v185
    %v734 = vunpack.c.l.b16 %v186
    %v735 = vunpack.c.h.b16 %v186
    %v736 = vunpack.c.l.b16 %v187
    %v737 = vunpack.c.h.b16 %v187
    %v738 = vunpack.c.l.b16 %v188
    %v739 = vunpack.c.h.b16 %v188
    %v740 = vunpack.c.l.b16 %v189
    %v741 = vunpack.c.h.b16 %v189
    %v742 = vunpack.c.l.b16 %v190
    %v743 = vunpack.c.h.b16 %v190
    %v744 = vunpack.c.l.b16 %v191
    %v745 = vunpack.c.h.b16 %v191
    %v746 = vunpack.c.l.b16 %v192
    %v747 = vunpack.c.h.b16 %v192
    %v748 = vunpack.c.l.b16 %v193
    %v749 = vunpack.c.h.b16 %v193
    %v750 = vunpack.c.l.b16 %v194
    %v751 = vunpack.c.h.b16 %v194
    %v752 = vunpack.c.l.b16 %v195
    %v753 = vunpack.c.h.b16 %v195
    %v754 = vunpack.c.l.b16 %v196
    %v755 = vunpack.c.h.b16 %v196
    %v756 = vunpack.c.l.b16 %v197
    %v757 = vunpack.c.h.b16 %v197
    %v758 = vunpack.c.l.b16 %v198
    %v759 = vunpack.c.h.b16 %v198
    %v760 = vunpack.c.l.b16 %v199
    %v761 = vunpack.c.h.b16 %v199
    %v762 = vunpack.c.l.b16 %v200
    %v763 = vunpack.c.h.b16 %v200
    %v764 = vunpack.c.l.b16 %v201
    %v765 = vunpack.c.h.b16 %v201
    %v766 = vunpack.c.l.b16 %v202
    %v767 = vunpack.c.h.b16 %v202
    %v768 = vunpack.c.l.b16 %v203
    %v769 = vunpack.c.h.b16 %v203
    %v770 = vunpack.c.l.b16 %v204
    %v771 = vunpack.c.h.b16 %v204
    %v772 = vunpack.c.l.b16 %v205
    %v773 = vunpack.c.h.b16 %v205
    %v774 = vunpack.c.l.b16 %v206
    %v775 = vunpack.c.h.b16 %v206
    %v776 = vunpack.c.l.b16 %v207
    %v777 = vunpack.c.h.b16 %v207
    %v778 = vunpack.c.l.b16 %v208
    %v779 = vunpack.c.h.b16 %v208
    %v780 = vunpack.c.l.b16 %v209
    %v781 = vunpack.c.h.b16 %v209
    %v782 = vunpack.c.l.b16 %v210
    %v783 = vunpack.c.h.b16 %v210
    %v784 = vunpack.c.l.b16 %v211
    %v785 = vunpack.c.h.b16 %v211
    %v786 = vunpack.c.l.b16 %v212
    %v787 = vunpack.c.h.b16 %v212
    %v788 = vunpack.c.l.b16 %v213
    %v789 = vunpack.c.h.b16 %v213
    %v790 = vunpack.c.l.b16 %v214
    %v791 = vunpack.c.h.b16 %v214
    %v792 = vunpack.c.l.b16 %v215
    %v793 = vunpack.c.h.b16 %v215
    %v794 = vunpack.c.l.b16 %v216
    %v795 = vunpack.c.h.b16 %v216
    %v796 = vunpack.c.l.b16 %v217
    %v797 = vunpack.c.h.b16 %v217
    %v798 = vunpack.c.l.b16 %v218
    %v799 = vunpack.c.h.b16 %v218
    %v800 = vunpack.c.l.b16 %v219
    %v801 = vunpack.c.h.b16 %v219
    %v802 = vunpack.c.l.b16 %v220
    %v803 = vunpack.c.h.b16 %v220
    %v804 = vunpack.c.l.b16 %v221
    %v805 = vunpack.c.h.b16 %v221
    %v806 = vunpack.c.l.b16 %v222
    %v807 = vunpack.c.h.b16 %v222
    %v808 = vunpack.c.l.b16 %v223
    %v809 = vunpack.c.h.b16 %v223
    %v810 = vunpack.c.l.b16 %v224
    %v811 = vunpack.c.h.b16 %v224
    %v812 = vunpack.c.l.b16 %v225
    %v813 = vunpack.c.h.b16 %v225
    %v814 = vunpack.c.l.b16 %v226
    %v815 = vunpack.c.h.b16 %v226
    %v816 = vunpack.c.l.b16 %v227
    %v817 = vunpack.c.h.b16 %v227
    %v818 = vunpack.c.l.b16 %v228
    %v819 = vunpack.c.h.b16 %v228
    %v820 = vunpack.c.l.b16 %v229
    %v821 = vunpack.c.h.b16 %v229
    %v822 = vunpack.c.l.b16 %v230
    %v823 = vunpack.c.h.b16 %v230
    %v824 = vunpack.c.l.b16 %v231
    %v825 = vunpack.c.h.b16 %v231
    %v826 = vunpack.c.l.b16 %v232
    %v827 = vunpack.c.h.b16 %v232
    %v828 = vunpack.c.l.b16 %v233
    %v829 = vunpack.c.h.b16 %v233
    %v830 = vunpack.c.l.b16 %v234
    %v831 = vunpack.c.h.b16 %v234
    %v832 = vunpack.c.l.b16 %v235
    %v833 = vunpack.c.h.b16 %v235
    %v834 = vunpack.c.l.b16 %v236
    %v835 = vunpack.c.h.b16 %v236
    %v836 = vunpack.c.l.b16 %v237
    %v837 = vunpack.c.h.b16 %v237
    %v838 = vunpack.c.l.b16 %v238
    %v839 = vunpack.c.h.b16 %v238
    %v840 = vunpack.c.l.b16 %v239
    %v841 = vunpack.c.h.b16 %v239
    %v842 = vunpack.c.l.b16 %v240
    %v843 = vunpack.c.h.b16 %v240
    %v844 = vunpack.c.l.b16 %v241
    %v845 = vunpack.c.h.b16 %v241
    %v846 = vunpack.c.l.b16 %v242
    %v847 = vunpack.c.h.b16 %v242
    %v848 = vunpack.c.l.b16 %v243
    %v849 = vunpack.c.h.b16 %v243
    %v850 = vunpack.c.l.b16 %v244
    %v851 = vunpack.c.h.b16 %v244
    %v852 = vunpack.c.l.b16 %v245
    %v853 = vunpack.c.h.b16 %v245
    %v854 = vunpack.c.l.b16 %v246
    %v855 = vunpack.c.h.b16 %v246
    %v856 = vunpack.c.l.b16 %v247
    %v857 = vunpack.c.h.b16 %v247
    %v858 = vunpack.c.l.b16 %v248
    %v859 = vunpack.c.h.b16 %v248
    %v860 = vunpack.c.l.b16 %v249
    %v861 = vunpack.c.h.b16 %v249
    %v862 = vunpack.c.l.b16 %v250
    %v863 = vunpack.c.h.b16 %v250
    %v864 = vunpack.c.l.b16 %v251
    %v865 = vunpack.c.h.b16 %v251
    %v866 = vunpack.c.l.b16 %v252
    %v867 = vunpack.c.h.b16 %v252
    %v868 = vunpack.c.l.b16 %v253
    %v869 = vunpack.c.h.b16 %v253
    %v870 = vunpack.c.l.b16 %v254
    %v871 = vunpack.c.h.b16 %v254
    %v872 = vunpack.c.l.b16 %v255
    %v873 = vunpack.c.h.b16 %v255
    %v874 = vunpack.c.l.b16 %v256
    %v875 = vunpack.c.h.b16 %v256
    %v876 = vunpack.c.l.b16 %v257
    %v877 = vunpack.c.h.b16 %v257
    %v878 = vunpack.c.l.b16 %v258
    %v879 = vunpack.c.h.b16 %v258
    %v880 = vunpack.c.l.b16 %v259
    %v881 = vunpack.c.h.b16 %v259
    %v882 = vunpack.c.l.b16 %v260
    %v883 = vunpack.c.h.b16 %v260
    %v884 = vunpack.c.l.b16 %v261
    %v885 = vunpack.c.h.b16 %v261
    %v886 = vunpack.c.l.b16 %v262
    %v887 = vunpack.c.h.b16 %v262
    %v888 = vunpack.c.l.b16 %v263
    %v889 = vunpack.c.h.b16 %v263
    %v890 = vunpack.c.l.b16 %v264
    %v891 = vunpack.c.h.b16 %v264
    %v892 = vunpack.c.l.b16 %v265
    %v893 = vunpack.c.h.b16 %v265
    %v894 = vunpack.c.l.b16 %v266
    %v895 = vunpack.c.h.b16 %v266
    %v896 = vunpack.c.l.b16 %v267
    %v897 = vunpack.c.h.b16 %v267
    %v898 = vunpack.c.l.b16 %v268
    %v899 = vunpack.c.h.b16 %v268
    %v900 = vunpack.c.l.b16 %v269
    %v901 = vunpack.c.h.b16 %v269
    %v902 = vunpack.c.l.b16 %v270
    %v903 = vunpack.c.h.b16 %v270
    %v904 = vunpack.c.l.b16 %v271
    %v905 = vunpack.c.h.b16 %v271
    %v906 = vunpack.c.l.b16 %v272
    %v907 = vunpack.c.h.b16 %v272
    %v908 = vunpack.c.l.b16 %v273
    %v909 = vunpack.c.h.b16 %v273
    %v910 = vunpack.c.l.b16 %v274
    %v911 = vunpack.c.h.b16 %v274
    %v912 = vunpack.c.l.b16 %v275
    %v913 = vunpack.c.h.b16 %v275
    %v914 = vunpack.c.l.b16 %v276
    %v915 = vunpack.c.h.b16 %v276
    %v916 = vunpack.c.l.b16 %v277
    %v917 = vunpack.c.h.b16 %v277
    %v918 = vunpack.c.l.b16 %v278
    %v919 = vunpack.c.h.b16 %v278
    %v920 = vunpack.c.l.b16 %v279
    %v921 = vunpack.c.h.b16 %v279
    %v922 = vunpack.c.l.b16 %v280
    %v923 = vunpack.c.h.b16 %v280
    %v924 = vunpack.c.l.b16 %v281
    %v925 = vunpack.c.h.b16 %v281
    %v926 = vunpack.c.l.b16 %v282
    %v927 = vunpack.c.h.b16 %v282
    %v928 = vunpack.c.l.b16 %v283
    %v929 = vunpack.c.h.b16 %v283
    %v930 = vunpack.c.l.b16 %v284
    %v931 = vunpack.c.h.b16 %v284
    %v932 = vunpack.c.l.b16 %v285
    %v933 = vunpack.c.h.b16 %v285
    %v934 = vunpack.c.l.b16 %v286
    %v935 = vunpack.c.h.b16 %v286
    %v936 = vunpack.c.l.b16 %v287
    %v937 = vunpack.c.h.b16 %v287
    %v938 = vunpack.c.l.b16 %v288
    %v939 = vunpack.c.h.b16 %v288
    %v940 = vunpack.c.l.b16 %v289
    %v941 = vunpack.c.h.b16 %v289
    %v942 = vunpack.c.l.b16 %v290
    %v943 = vunpack.c.h.b16 %v290
    %v944 = vunpack.c.l.b16 %v291
    %v945 = vunpack.c.h.b16 %v291
    %v946 = vunpack.c.l.b16 %v292
    %v947 = vunpack.c.h.b16 %v292
    %v948 = vunpack.c.l.b16 %v293
    %v949 = vunpack.c.h.b16 %v293
    %v950 = vunpack.c.l.b16 %v294
    %v951 = vunpack.c.h.b16 %v294
    %v952 = vunpack.c.l.b16 %v295
    %v953 = vunpack.c.h.b16 %v295
    %v954 = vunpack.c.l.b16 %v296
    %v955 = vunpack.c.h.b16 %v296
    %v956 = vunpack.c.l.b16 %v297
    %v957 = vunpack.c.h.b16 %v297
    %v958 = vunpack.c.l.b16 %v298
    %v959 = vunpack.c.h.b16 %v298
    %v960 = vunpack.c.l.b16 %v299
    %v961 = vunpack.c.h.b16 %v299
    %v962 = vunpack.c.l.b16 %v300
    %v963 = vunpack.c.h.b16 %v300
    %v964 = vunpack.c.l.b16 %v301
    %v965 = vunpack.c.h.b16 %v301
    %v966 = vunpack.c.l.b16 %v302
    %v967 = vunpack.c.h.b16 %v302
    %v968 = vunpack.c.l.b16 %v303
    %v969 = vunpack.c.h.b16 %v303
    %v970 = vunpack.c.l.b16 %v304
    %v971 = vunpack.c.h.b16 %v304
    %v972 = vunpack.c.l.b16 %v305
    %v973 = vunpack.c.h.b16 %v305
    %v974 = vunpack.c.l.b16 %v306
    %v975 = vunpack.c.h.b16 %v306
    %v976 = vunpack.c.l.b16 %v307
    %v977 = vunpack.c.h.b16 %v307
    %v978 = vunpack.c.l.b16 %v308
    %v979 = vunpack.c.h.b16 %v308
    %v980 = vunpack.c.l.b16 %v309
    %v981 = vunpack.c.h.b16 %v309
    %v982 = vunpack.c.l.b16 %v310
    %v983 = vunpack.c.h.b16 %v310
    %v984 = vunpack.c.l.b16 %v311
    %v985 = vunpack.c.h.b16 %v311
    %v986 = vunpack.c.l.b16 %v312
    %v987 = vunpack.c.h.b16 %v312
    %v988 = vunpack.c.l.b16 %v313
    %v989 = vunpack.c.h.b16 %v313
    %v990 = vunpack.c.l.b16 %v314
    %v991 = vunpack.c.h.b16 %v314
    %v992 = vunpack.c.l.b16 %v315
    %v993 = vunpack.c.h.b16 %v315
    %v994 = vunpack.c.l.b16 %v316
    %v995 = vunpack.c.h.b16 %v316
    %v996 = vunpack.c.l.b16 %v317
    %v997 = vunpack.c.h.b16 %v317
    %v998 = vunpack.c.l.b16 %v318
    %v999 = vunpack.c.h.b16 %v318
    %v1000 = vunpack.c.l.b16 %v319
    %v1001 = vunpack.c.h.b16 %v319
    %v1002 = vunpack.c.l.b16 %v320
    %v1003 = vunpack.c.h.b16 %v320
    %v1004 = vunpack.c.l.b16 %v321
    %v1005 = vunpack.c.h.b16 %v321
    %v1006 = vunpack.c.l.b16 %v322
    %v1007 = vunpack.c.h.b16 %v322
    %v1008 = vunpack.c.l.b16 %v323
    %v1009 = vunpack.c.h.b16 %v323
    %v1010 = vunpack.c.l.b16 %v324
    %v1011 = vunpack.c.h.b16 %v324
    %v1012 = vunpack.c.l.b16 %v325
    %v1013 = vunpack.c.h.b16 %v325
    %v1014 = vunpack.c.l.b16 %v326
    %v1015 = vunpack.c.h.b16 %v326
    %v1016 = vunpack.c.l.b16 %v327
    %v1017 = vunpack.c.h.b16 %v327
    %v1018 = vunpack.c.l.b16 %v328
    %v1019 = vunpack.c.h.b16 %v328
    %v1020 = vunpack.c.l.b16 %v329
    %v1021 = vunpack.c.h.b16 %v329
    %v1022 = vunpack.c.l.b16 %v330
    %v1023 = vunpack.c.h.b16 %v330
    %v1024 = vunpack.c.l.b16 %v331
    %v1025 = vunpack.c.h.b16 %v331
    %v1026 = vunpack.c.l.b16 %v332
    %v1027 = vunpack.c.h.b16 %v332
    %v1028 = vunpack.c.l.b16 %v333
    %v1029 = vunpack.c.h.b16 %v333
    %v1030 = vunpack.c.l.b16 %v334
    %v1031 = vunpack.c.h.b16 %v334
    %v1032 = vunpack.c.l.b16 %v335
    %v1033 = vunpack.c.h.b16 %v335
    %v1034 = vunpack.c.l.b16 %v336
    %v1035 = vunpack.c.h.b16 %v336
    %v1036 = vunpack.c.l.b16 %v337
    %v1037 = vunpack.c.h.b16 %v337
    %v1038 = vunpack.c.l.b16 %v338
    %v1039 = vunpack.c.h.b16 %v338
    %v1040 = vunpack.c.l.b16 %v339
    %v1041 = vunpack.c.h.b16 %v339
    %v1042 = vunpack.c.l.b16 %v340
    %v1043 = vunpack.c.h.b16 %v340
    %v1044 = vunpack.c.l.b16 %v341
    %v1045 = vunpack.c.h.b16 %v341
    %v1046 = vunpack.c.l.b16 %v342
    %v1047 = vunpack.c.h.b16 %v342
    %v1048 = vunpack.c.l.b16 %v343
    %v1049 = vunpack.c.h.b16 %v343
    %v1050 = vunpack.c.l.b16 %v344
    %v1051 = vunpack.c.h.b16 %v344
    %v1052 = vunpack.c.l.b16 %v345
    %v1053 = vunpack.c.h.b16 %v345
    %v1054 = vunpack.c.l.b16 %v346
    %v1055 = vunpack.c.h.b16 %v346
    %v1056 = vunpack.c.l.b16 %v347
    %v1057 = vunpack.c.h.b16 %v347
    %v1058 = vunpack.c.l.b16 %v348
    %v1059 = vunpack.c.h.b16 %v348
    %v1060 = vunpack.c.l.b16 %v349
    %v1061 = vunpack.c.h.b16 %v349
    %v1062 = vunpack.c.l.b16 %v350
    %v1063 = vunpack.c.h.b16 %v350
    %v1064 = vunpack.c.l.b16 %v351
    %v1065 = vunpack.c.h.b16 %v351
    %v1066 = vunpack.c.l.b16 %v352
    %v1067 = vunpack.c.h.b16 %v352
    %v1068 = vunpack.c.l.b16 %v353
    %v1069 = vunpack.c.h.b16 %v353
    %v1070 = vunpack.c.l.b16 %v354
    %v1071 = vunpack.c.h.b16 %v354
    %v1072 = vunpack.c.l.b16 %v355
    %v1073 = vunpack.c.h.b16 %v355
    %v1074 = vunpack.c.l.b16 %v356
    %v1075 = vunpack.c.h.b16 %v356
    %v1076 = vunpack.c.l.b16 %v357
    %v1077 = vunpack.c.h.b16 %v357
    %v1078 = vunpack.c.l.b16 %v358
    %v1079 = vunpack.c.h.b16 %v358
    %v1080 = vunpack.c.l.b16 %v359
    %v1081 = vunpack.c.h.b16 %v359
    %v1082 = vunpack.c.l.b16 %v360
    %v1083 = vunpack.c.h.b16 %v360
    %v1084 = vunpack.c.l.b16 %v361
    %v1085 = vunpack.c.h.b16 %v361
    %v1086 = vunpack.c.l.b16 %v362
    %v1087 = vunpack.c.h.b16 %v362
    %v1088 = vunpack.c.l.b16 %v363
    %v1089 = vunpack.c.h.b16 %v363
    %v1090 = vunpack.c.l.b16 %v364
    %v1091 = vunpack.c.h.b16 %v364
    %v1092 = vunpack.c.l.b16 %v365
    %v1093 = vunpack.c.h.b16 %v365
    %v1094 = vunpack.c.l.b16 %v366
    %v1095 = vunpack.c.h.b16 %v366
    %v1096 = vunpack.c.l.b16 %v367
    %v1097 = vunpack.c.h.b16 %v367
    %v1098 = vunpack.c.l.b16 %v368
    %v1099 = vunpack.c.h.b16 %v368
    %v1100 = vunpack.c.l.b16 %v369
    %v1101 = vunpack.c.h.b16 %v369
    %v1102 = vunpack.c.l.b16 %v370
    %v1103 = vunpack.c.h.b16 %v370
    %v1104 = vunpack.c.l.b16 %v371
    %v1105 = vunpack.c.h.b16 %v371
    %v1106 = vunpack.c.l.b16 %v372
    %v1107 = vunpack.c.h.b16 %v372
    %v1108 = vunpack.c.l.b16 %v373
    %v1109 = vunpack.c.h.b16 %v373
    %v1110 = vunpack.c.l.b16 %v374
    %v1111 = vunpack.c.h.b16 %v374
    %v1112 = vunpack.c.l.b16 %v375
    %v1113 = vunpack.c.h.b16 %v375
    %v1114 = vunpack.c.l.b16 %v376
    %v1115 = vunpack.c.h.b16 %v376
    %v1116 = vunpack.c.l.b16 %v377
    %v1117 = vunpack.c.h.b16 %v377
    %v1118 = vunpack.c.l.b16 %v378
    %v1119 = vunpack.c.h.b16 %v378
    %v1120 = vunpack.c.l.b16 %v379
    %v1121 = vunpack.c.h.b16 %v379
    %v1122 = vunpack.c.l.b16 %v380
    %v1123 = vunpack.c.h.b16 %v380
    %v1124 = vunpack.c.l.b16 %v381
    %v1125 = vunpack.c.h.b16 %v381
    %v1126 = vunpack.c.l.b16 %v382
    %v1127 = vunpack.c.h.b16 %v382
    %v1128 = vunpack.c.l.b16 %v383
    %v1129 = vunpack.c.h.b16 %v383
    %v1130 = vunpack.c.l.b16 %v384
    %v1131 = vunpack.c.h.b16 %v384
    %v1132 = vunpack.c.l.b16 %v385
    %v1133 = vunpack.c.h.b16 %v385
    %v1134 = vunpack.c.l.b16 %v386
    %v1135 = vunpack.c.h.b16 %v386
    %v1136 = vunpack.c.l.b16 %v387
    %v1137 = vunpack.c.h.b16 %v387
    %v1138 = vunpack.c.l.b16 %v388
    %v1139 = vunpack.c.h.b16 %v388
    %v1140 = vunpack.c.l.b16 %v389
    %v1141 = vunpack.c.h.b16 %v389
    %v1142 = vunpack.c.l.b16 %v390
    %v1143 = vunpack.c.h.b16 %v390
    %v1144 = vunpack.c.l.b16 %v391
    %v1145 = vunpack.c.h.b16 %v391
    %v1146 = vunpack.c.l.b16 %v392
    %v1147 = vunpack.c.h.b16 %v392
    %v1148 = vunpack.c.l.b16 %v393
    %v1149 = vunpack.c.h.b16 %v393
    %v1150 = vunpack.c.l.b16 %v394
    %v1151 = vunpack.c.h.b16 %v394
    %v1152 = vunpack.c.l.b16 %v395
    %v1153 = vunpack.c.h.b16 %v395
    %v1154 = vunpack.c.l.b16 %v396
    %v1155 = vunpack.c.h.b16 %v396
    %v1156 = vunpack.c.l.b16 %v397
    %v1157 = vunpack.c.h.b16 %v397
    %v1158 = vunpack.c.l.b16 %v398
    %v1159 = vunpack.c.h.b16 %v398
    %v1160 = vunpack.c.l.b16 %v399
    %v1161 = vunpack.c.h.b16 %v399
    %v1162 = vunpack.c.l.b16 %v400
    %v1163 = vunpack.c.h.b16 %v400
    %v1164 = vunpack.c.l.b16 %v401
    %v1165 = vunpack.c.h.b16 %v401
    %v1166 = vunpack.c.l.b16 %v402
    %v1167 = vunpack.c.h.b16 %v402
    %v1168 = vunpack.c.l.b16 %v403
    %v1169 = vunpack.c.h.b16 %v403
    %v1170 = vunpack.c.l.b16 %v404
    %v1171 = vunpack.c.h.b16 %v404
    %v1172 = vunpack.c.l.b16 %v405
    %v1173 = vunpack.c.h.b16 %v405
    %v1174 = vunpack.c.l.b16 %v406
    %v1175 = vunpack.c.h.b16 %v406
    %v1176 = vunpack.c.l.b16 %v407
    %v1177 = vunpack.c.h.b16 %v407
    %v1178 = vunpack.c.l.b16 %v408
    %v1179 = vunpack.c.h.b16 %v408
    %v1180 = vunpack.c.l.b16 %v409
    %v1181 = vunpack.c.h.b16 %v409
    %v1182 = vunpack.c.l.b16 %v410
    %v1183 = vunpack.c.h.b16 %v410
    %v1184 = vunpack.c.l.b16 %v411
    %v1185 = vunpack.c.h.b16 %v411
    %v1186 = vunpack.c.l.b16 %v412
    %v1187 = vunpack.c.h.b16 %v412
    %v1188 = vunpack.c.l.b16 %v413
    %v1189 = vunpack.c.h.b16 %v413
    %v1190 = vunpack.c.l.b16 %v414
    %v1191 = vunpack.c.h.b16 %v414
    %v1192 = vunpack.c.l.b16 %v415
    %v1193 = vunpack.c.h.b16 %v415
    %v1194 = vunpack.c.l.b16 %v416
    %v1195 = vunpack.c.h.b16 %v416
    %v1196 = vunpack.c.l.b16 %v417
    %v1197 = vunpack.c.h.b16 %v417
    %v1198 = vunpack.c.l.b16 %v418
    %v1199 = vunpack.c.h.b16 %v418
    %v1200 = vunpack.c.l.b16 %v419
    %v1201 = vunpack.c.h.b16 %v419
    %v1202 = vunpack.c.l.b16 %v420
    %v1203 = vunpack.c.h.b16 %v420
    %v1204 = vunpack.c.l.b16 %v421
    %v1205 = vunpack.c.h.b16 %v421
    %v1206 = vunpack.c.l.b16 %v422
    %v1207 = vunpack.c.h.b16 %v422
    %v1208 = vunpack.c.l.b16 %v423
    %v1209 = vunpack.c.h.b16 %v423
    %v1210 = vunpack.c.l.b16 %v424
    %v1211 = vunpack.c.h.b16 %v424
    %v1212 = vunpack.c.l.b16 %v425
    %v1213 = vunpack.c.h.b16 %v425
    %v1214 = vunpack.c.l.b16 %v426
    %v1215 = vunpack.c.h.b16 %v426
    %v1216 = vunpack.c.l.b16 %v427
    %v1217 = vunpack.c.h.b16 %v427
    %v1218 = vpack.c.b16 %v710, %v706
    %v1219 = vpack.c.b16 %v711, %v707
    %v1220 = vpack.c.b16 %v712, %v708
    %v1221 = vpack.c.b16 %v713, %v709
    %v1222 = vpack.c.b16 %v718, %v714
    %v1223 = vpack.c.b16 %v719, %v715
    %v1224 = vpack.c.b16 %v720, %v716
    %v1225 = vpack.c.b16 %v721, %v717
    %v1226 = vpack.c.b16 %v726, %v722
    %v1227 = vpack.c.b16 %v727, %v723
    %v1228 = vpack.c.b16 %v728, %v724
    %v1229 = vpack.c.b16 %v729, %v725
    %v1230 = vpack.c.b16 %v734, %v730
    %v1231 = vpack.c.b16 %v735, %v731
    %v1232 = vpack.c.b16 %v736, %v732
    %v1233 = vpack.c.b16 %v737, %v733
    %v1234 = vpack.c.b16 %v742, %v738
    %v1235 = vpack.c.b16 %v743, %v739
    %v1236 = vpack.c.b16 %v744, %v740
    %v1237 = vpack.c.b16 %v745, %v741
    %v1238 = vpack.c.b16 %v750, %v746
    %v1239 = vpack.c.b16 %v751, %v747
    %v1240 = vpack.c.b16 %v752, %v748
    %v1241 = vpack.c.b16 %v753, %v749
    %v1242 = vpack.c.b16 %v758, %v754
    %v1243 = vpack.c.b16 %v759, %v755
    %v1244 = vpack.c.b16 %v760, %v756
    %v1245 = vpack.c.b16 %v761, %v757
    %v1246 = vpack.c.b16 %v766, %v762
    %v1247 = vpack.c.b16 %v767, %v763
    %v1248 = vpack.c.b16 %v768, %v764
    %v1249 = vpack.c.b16 %v769, %v765
    %v1250 = vpack.c.b16 %v774, %v770
    %v1251 = vpack.c.b16 %v775, %v771
    %v1252 = vpack.c.b16 %v776, %v772
    %v1253 = vpack.c.b16 %v777, %v773
    %v1254 = vpack.c.b16 %v782, %v778
    %v1255 = vpack.c.b16 %v783, %v779
    %v1256 = vpack.c.b16 %v784, %v780
    %v1257 = vpack.c.b16 %v785, %v781
    %v1258 = vpack.c.b16 %v790, %v786
    %v1259 = vpack.c.b16 %v791, %v787
    %v1260 = vpack.c.b16 %v792, %v788
    %v1261 = vpack.c.b16 %v793, %v789
    %v1262 = vpack.c.b16 %v798, %v794
    %v1263 = vpack.c.b16 %v799, %v795
    %v1264 = vpack.c.b16 %v800, %v796
    %v1265 = vpack.c.b16 %v801, %v797
    %v1266 = vpack.c.b16 %v806, %v802
    %v1267 = vpack.c.b16 %v807, %v803
    %v1268 = vpack.c.b16 %v808, %v804
    %v1269 = vpack.c.b16 %v809, %v805
    %v1270 = vpack.c.b16 %v814, %v810
    %v1271 = vpack.c.b16 %v815, %v811
    %v1272 = vpack.c.b16 %v816, %v812
    %v1273 = vpack.c.b16 %v817, %v813
    %v1274 = vpack.c.b16 %v822, %v818
    %v1275 = vpack.c.b16 %v823, %v819
    %v1276 = vpack.c.b16 %v824, %v820
    %v1277 = vpack.c.b16 %v825, %v821
    %v1278 = vpack.c.b16 %v830, %v826
    %v1279 = vpack.c.b16 %v831, %v827
    %v1280 = vpack.c.b16 %v832, %v828
    %v1281 = vpack.c.b16 %v833, %v829
    %v1282 = vpack.c.b16 %v838, %v834
    %v1283 = vpack.c.b16 %v839, %v835
    %v1284 = vpack.c.b16 %v840, %v836
    %v1285 = vpack.c.b16 %v841, %v837
    %v1286 = vpack.c.b16 %v846, %v842
    %v1287 = vpack.c.b16 %v847, %v843
    %v1288 = vpack.c.b16 %v848, %v844
    %v1289 = vpack.c.b16 %v849, %v845
    %v1290 = vpack.c.b16 %v854, %v850
    %v1291 = vpack.c.b16 %v855, %v851
    %v1292 = vpack.c.b16 %v856, %v852
    %v1293 = vpack.c.b16 %v857, %v853
    %v1294 = vpack.c.b16 %v862, %v858
    %v1295 = vpack.c.b16 %v863, %v859
    %v1296 = vpack.c.b16 %v864, %v860
    %v1297 = vpack.c.b16 %v865, %v861
    %v1298 = vpack.c.b16 %v870, %v866
    %v1299 = vpack.c.b16 %v871, %v867
    %v1300 = vpack.c.b16 %v872, %v868
    %v1301 = vpack.c.b16 %v873, %v869
    %v1302 = vpack.c.b16 %v878, %v874
    %v1303 = vpack.c.b16 %v879, %v875
    %v1304 = vpack.c.b16 %v880, %v876
    %v1305 = vpack.c.b16 %v881, %v877
    %v1306 = vpack.c.b16 %v886, %v882
    %v1307 = vpack.c.b16 %v887, %v883
    %v1308 = vpack.c.b16 %v888, %v884
    %v1309 = vpack.c.b16 %v889, %v885
    %v1310 = vpack.c.b16 %v894, %v890
    %v1311 = vpack.c.b16 %v895, %v891
    %v1312 = vpack.c.b16 %v896, %v892
    %v1313 = vpack.c.b16 %v897, %v893
    %v1314 = vpack.c.b16 %v902, %v898
    %v1315 = vpack.c.b16 %v903, %v899
    %v1316 = vpack.c.b16 %v904, %v900
    %v1317 = vpack.c.b16 %v905, %v901
    %v1318 = vpack.c.b16 %v910, %v906
    %v1319 = vpack.c.b16 %v911, %v907
    %v1320 = vpack.c.b16 %v912, %v908
    %v1321 = vpack.c.b16 %v913, %v909
    %v1322 = vpack.c.b16 %v918, %v914
    %v1323 = vpack.c.b16 %v919, %v915
    %v1324 = vpack.c.b16 %v920, %v916
    %v1325 = vpack.c.b16 %v921, %v917
    %v1326 = vpack.c.b16 %v926, %v922
    %v1327 = vpack.c.b16 %v927, %v923
    %v1328 = vpack.c.b16 %v928, %v924
    %v1329 = vpack.c.b16 %v929, %v925
    %v1330 = vpack.c.b16 %v934, %v930
    %v1331 = vpack.c.b16 %v935, %v931
    %v1332 = vpack.c.b16 %v936, %v932
    %v1333 = vpack.c.b16 %v937, %v933
    %v1334 = vpack.c.b16 %v942, %v938
    %v1335 = vpack.c.b16 %v943, %v939
    %v1336 = vpack.c.b16 %v944, %v940
    %v1337 = vpack.c.b16 %v945, %v941
    %v1338 = vpack.c.b16 %v950, %v946
    %v1339 = vpack.c.b16 %v951, %v947
    %v1340 = vpack.c.b16 %v952, %v948
    %v1341 = vpack.c.b16 %v953, %v949
    %v1342 = vpack.c.b16 %v958, %v954
    %v1343 = vpack.c.b16 %v959, %v955
    %v1344 = vpack.c.b16 %v960, %v956
    %v1345 = vpack.c.b16 %v961, %v957
    %v1346 = vpack.c.b16 %v966, %v962
    %v1347 = vpack.c.b16 %v967, %v963
    %v1348 = vpack.c.b16 %v968, %v964
    %v1349 = vpack.c.b16 %v969, %v965
    %v1350 = vpack.c.b16 %v974, %v970
    %v1351 = vpack.c.b16 %v975, %v971
    %v1352 = vpack.c.b16 %v976, %v972
    %v1353 = vpack.c.b16 %v977, %v973
    %v1354 = vpack.c.b16 %v982, %v978
    %v1355 = vpack.c.b16 %v983, %v979
    %v1356 = vpack.c.b16 %v984, %v980
    %v1357 = vpack.c.b16 %v985, %v981
    %v1358 = vpack.c.b16 %v990, %v986
    %v1359 = vpack.c.b16 %v991, %v987
    %v1360 = vpack.c.b16 %v992, %v988
    %v1361 = vpack.c.b16 %v993, %v989
    %v1362 = vpack.c.b16 %v998, %v994
    %v1363 = vpack.c.b16 %v999, %v995
    %v1364 = vpack.c.b16 %v1000, %v996
    %v1365 = vpack.c.b16 %v1001, %v997
    %v1366 = vpack.c.b16 %v1006, %v1002
    %v1367 = vpack.c.b16 %v1007, %v1003
    %v1368 = vpack.c.b16 %v1008, %v1004
    %v1369 = vpack.c.b16 %v1009, %v1005
    %v1370 = vpack.c.b16 %v1014, %v1010
    %v1371 = vpack.c.b16 %v1015, %v1011
    %v1372 = vpack.c.b16 %v1016, %v1012
    %v1373 = vpack.c.b16 %v1017, %v1013
    %v1374 = vpack.c.b16 %v1022, %v1018
    %v1375 = vpack.c.b16 %v1023, %v1019
    %v1376 = vpack.c.b16 %v1024, %v1020
    %v1377 = vpack.c.b16 %v1025, %v1021
    %v1378 = vpack.c.b16 %v1030, %v1026
    %v1379 = vpack.c.b16 %v1031, %v1027
    %v1380 = vpack.c.b16 %v1032, %v1028
    %v1381 = vpack.c.b16 %v1033, %v1029
    %v1382 = vpack.c.b16 %v1038, %v1034
    %v1383 = vpack.c.b16 %v1039, %v1035
    %v1384 = vpack.c.b16 %v1040, %v1036
    %v1385 = vpack.c.b16 %v1041, %v1037
    %v1386 = vpack.c.b16 %v1046, %v1042
    %v1387 = vpack.c.b16 %v1047, %v1043
    %v1388 = vpack.c.b16 %v1048, %v1044
    %v1389 = vpack.c.b16 %v1049, %v1045
    %v1390 = vpack.c.b16 %v1054, %v1050
    %v1391 = vpack.c.b16 %v1055, %v1051
    %v1392 = vpack.c.b16 %v1056, %v1052
    %v1393 = vpack.c.b16 %v1057, %v1053
    %v1394 = vpack.c.b16 %v1062, %v1058
    %v1395 = vpack.c.b16 %v1063, %v1059
    %v1396 = vpack.c.b16 %v1064, %v1060
    %v1397 = vpack.c.b16 %v1065, %v1061
    %v1398 = vpack.c.b16 %v1070, %v1066
    %v1399 = vpack.c.b16 %v1071, %v1067
    %v1400 = vpack.c.b16 %v1072, %v1068
    %v1401 = vpack.c.b16 %v1073, %v1069
    %v1402 = vpack.c.b16 %v1078, %v1074
    %v1403 = vpack.c.b16 %v1079, %v1075
    %v1404 = vpack.c.b16 %v1080, %v1076
    %v1405 = vpack.c.b16 %v1081, %v1077
    %v1406 = vpack.c.b16 %v1086, %v1082
    %v1407 = vpack.c.b16 %v1087, %v1083
    %v1408 = vpack.c.b16 %v1088, %v1084
    %v1409 = vpack.c.b16 %v1089, %v1085
    %v1410 = vpack.c.b16 %v1094, %v1090
    %v1411 = vpack.c.b16 %v1095, %v1091
    %v1412 = vpack.c.b16 %v1096, %v1092
    %v1413 = vpack.c.b16 %v1097, %v1093
    %v1414 = vpack.c.b16 %v1102, %v1098
    %v1415 = vpack.c.b16 %v1103, %v1099
    %v1416 = vpack.c.b16 %v1104, %v1100
    %v1417 = vpack.c.b16 %v1105, %v1101
    %v1418 = vpack.c.b16 %v1110, %v1106
    %v1419 = vpack.c.b16 %v1111, %v1107
    %v1420 = vpack.c.b16 %v1112, %v1108
    %v1421 = vpack.c.b16 %v1113, %v1109
    %v1422 = vpack.c.b16 %v1118, %v1114
    %v1423 = vpack.c.b16 %v1119, %v1115
    %v1424 = vpack.c.b16 %v1120, %v1116
    %v1425 = vpack.c.b16 %v1121, %v1117
    %v1426 = vpack.c.b16 %v1126, %v1122
    %v1427 = vpack.c.b16 %v1127, %v1123
    %v1428 = vpack.c.b16 %v1128, %v1124
    %v1429 = vpack.c.b16 %v1129, %v1125
    %v1430 = vpack.c.b16 %v1134, %v1130
    %v1431 = vpack.c.b16 %v1135, %v1131
    %v1432 = vpack.c.b16 %v1136, %v1132
    %v1433 = vpack.c.b16 %v1137, %v1133
    %v1434 = vpack.c.b16 %v1142, %v1138
    %v1435 = vpack.c.b16 %v1143, %v1139
    %v1436 = vpack.c.b16 %v1144, %v1140
    %v1437 = vpack.c.b16 %v1145, %v1141
    %v1438 = vpack.c.b16 %v1150, %v1146
    %v1439 = vpack.c.b16 %v1151, %v1147
    %v1440 = vpack.c.b16 %v1152, %v1148
    %v1441 = vpack.c.b16 %v1153, %v1149
    %v1442 = vpack.c.b16 %v1158, %v1154
    %v1443 = vpack.c.b16 %v1159, %v1155
    %v1444 = vpack.c.b16 %v1160, %v1156
    %v1445 = vpack.c.b16 %v1161, %v1157
    %v1446 = vpack.c.b16 %v1166, %v1162
    %v1447 = vpack.c.b16 %v1167, %v1163
    %v1448 = vpack.c.b16 %v1168, %v1164
    %v1449 = vpack.c.b16 %v1169, %v1165
    %v1450 = vpack.c.b16 %v1174, %v1170
    %v1451 = vpack.c.b16 %v1175, %v1171
    %v1452 = vpack.c.b16 %v1176, %v1172
    %v1453 = vpack.c.b16 %v1177, %v1173
    %v1454 = vpack.c.b16 %v1182, %v1178
    %v1455 = vpack.c.b16 %v1183, %v1179
    %v1456 = vpack.c.b16 %v1184, %v1180
    %v1457 = vpack.c.b16 %v1185, %v1181
    %v1458 = vpack.c.b16 %v1190, %v1186
    %v1459 = vpack.c.b16 %v1191, %v1187
    %v1460 = vpack.c.b16 %v1192, %v1188
    %v1461 = vpack.c.b16 %v1193, %v1189
    %v1462 = vpack.c.b16 %v1198, %v1194
    %v1463 = vpack.c.b16 %v1199, %v1195
    %v1464 = vpack.c.b16 %v1200, %v1196
    %v1465 = vpack.c.b16 %v1201, %v1197
    %v1466 = vpack.c.b16 %v1206, %v1202
    %v1467 = vpack.c.b16 %v1207, %v1203
    %v1468 = vpack.c.b16 %v1208, %v1204
    %v1469 = vpack.c.b16 %v1209, %v1205
    %v1470 = vpack.c.b16 %v1214, %v1210
    %v1471 = vpack.c.b16 %v1215, %v1211
    %v1472 = vpack.c.b16 %v1216, %v1212
    %v1473 = vpack.c.b16 %v1217, %v1213
    %1730 = vmatprep.subr.bf16.mxu0 %v1219
    %1731 = vmatpush1.bf16.msra.mxu0 %v1218
    %1732 = vmatprep.subr.bf16.mxu0 %v1223
    %1733 = vmatpush1.bf16.msra.mxu0 %v1222
    %1734 = vmatprep.subr.bf16.mxu0 %v1227
    %1735 = vmatpush1.bf16.msra.mxu0 %v1226
    %1736 = vmatprep.subr.bf16.mxu0 %v1231
    %1737 = vmatpush1.bf16.msra.mxu0 %v1230
    %1738 = vmatprep.subr.bf16.mxu0 %v1235
    %1739 = vmatpush1.bf16.msra.mxu0 %v1234
    %1740 = vmatprep.subr.bf16.mxu0 %v1239
    %1741 = vmatpush1.bf16.msra.mxu0 %v1238
    %1742 = vmatprep.subr.bf16.mxu0 %v1243
    %1743 = vmatpush1.bf16.msra.mxu0 %v1242
    %1744 = vmatprep.subr.bf16.mxu0 %v1247
    %1745 = vmatpush1.bf16.msra.mxu0 %v1246
    %1746 = vmatprep.subr.bf16.mxu0 %v1251
    %1747 = vmatpush1.bf16.msra.mxu0 %v1250
    %1748 = vmatprep.subr.bf16.mxu0 %v1255
    %1749 = vmatpush1.bf16.msra.mxu0 %v1254
    %1750 = vmatprep.subr.bf16.mxu0 %v1259
    %1751 = vmatpush1.bf16.msra.mxu0 %v1258
    %1752 = vmatprep.subr.bf16.mxu0 %v1263
    %1753 = vmatpush1.bf16.msra.mxu0 %v1262
    %1754 = vmatprep.subr.bf16.mxu0 %v1267
    %1755 = vmatpush1.bf16.msra.mxu0 %v1266
    %1756 = vmatprep.subr.bf16.mxu0 %v1271
    %1757 = vmatpush1.bf16.msra.mxu0 %v1270
    %1758 = vmatprep.subr.bf16.mxu0 %v1275
    %1759 = vmatpush1.bf16.msra.mxu0 %v1274
    %1760 = vmatprep.subr.bf16.mxu0 %v1279
    %1761 = vmatpush1.bf16.msra.mxu0 %v1278
    %1762 = vmatprep.mubr.bf16.mxu0 %v165
    %1763 = vmatmul.mubr.bf16.gmra.mrb[0].mxu0 %v164
    %v1764 = vpop.f32.mrb[0].mxu0
    %v1765 = vadd.f32 %v433, %v1764
    %v1766 = vpop.f32.mrb[0].mxu0
    %v1767 = vadd.f32 %v437, %v1766
    %v1768 = vpop.f32.mrb[0].mxu0
    %v1769 = vpop.f32.mrb[0].mxu0
    %1770 = vdwg.mxu0
    %1771 = vmatprep.subr.bf16.mxu0 %v1283
    %1772 = vmatpush1.bf16.msra.mxu0 %v1282
    %1773 = vmatprep.subr.bf16.mxu0 %v1287
    %1774 = vmatpush1.bf16.msra.mxu0 %v1286
    %1775 = vmatprep.subr.bf16.mxu0 %v1291
    %1776 = vmatpush1.bf16.msra.mxu0 %v1290
    %1777 = vmatprep.subr.bf16.mxu0 %v1295
    %1778 = vmatpush1.bf16.msra.mxu0 %v1294
    %1779 = vmatprep.subr.bf16.mxu0 %v1299
    %1780 = vmatpush1.bf16.msra.mxu0 %v1298
    %1781 = vmatprep.subr.bf16.mxu0 %v1303
    %1782 = vmatpush1.bf16.msra.mxu0 %v1302
    %1783 = vmatprep.subr.bf16.mxu0 %v1307
    %1784 = vmatpush1.bf16.msra.mxu0 %v1306
    %1785 = vmatprep.subr.bf16.mxu0 %v1311
    %1786 = vmatpush1.bf16.msra.mxu0 %v1310
    %1787 = vmatprep.subr.bf16.mxu0 %v1315
    %1788 = vmatpush1.bf16.msra.mxu0 %v1314
    %1789 = vmatprep.subr.bf16.mxu0 %v1319
    %1790 = vmatpush1.bf16.msra.mxu0 %v1318
    %1791 = vmatprep.subr.bf16.mxu0 %v1323
    %1792 = vmatpush1.bf16.msra.mxu0 %v1322
    %1793 = vmatprep.subr.bf16.mxu0 %v1327
    %1794 = vmatpush1.bf16.msra.mxu0 %v1326
    %1795 = vmatprep.subr.bf16.mxu0 %v1331
    %1796 = vmatpush1.bf16.msra.mxu0 %v1330
    %1797 = vmatprep.subr.bf16.mxu0 %v1335
    %1798 = vmatpush1.bf16.msra.mxu0 %v1334
    %1799 = vmatprep.subr.bf16.mxu0 %v1339
    %1800 = vmatpush1.bf16.msra.mxu0 %v1338
    %1801 = vmatprep.subr.bf16.mxu0 %v1343
    %1802 = vmatpush1.bf16.msra.mxu0 %v1342
    %1803 = vmatprep.mubr.bf16.mxu0 %v167
    %1804 = vmatmul.mubr.bf16.gmra.mrb[0].mxu0 %v166
    %v1805 = vpop.f32.mrb[0].mxu0
    %v1806 = vadd.f32 %v1765, %v1805
    %v1807 = vpop.f32.mrb[0].mxu0
    %v1808 = vadd.f32 %v1767, %v1807
    %v1809 = vpop.f32.mrb[0].mxu0
    %v1810 = vpop.f32.mrb[0].mxu0
    %1811 = vdwg.mxu0
    %1812 = vmatprep.subr.bf16.mxu0 %v1347
    %1813 = vmatpush1.bf16.msra.mxu0 %v1346
    %1814 = vmatprep.subr.bf16.mxu0 %v1351
    %1815 = vmatpush1.bf16.msra.mxu0 %v1350
    %1816 = vmatprep.subr.bf16.mxu0 %v1355
    %1817 = vmatpush1.bf16.msra.mxu0 %v1354
    %1818 = vmatprep.subr.bf16.mxu0 %v1359
    %1819 = vmatpush1.bf16.msra.mxu0 %v1358
    %1820 = vmatprep.subr.bf16.mxu0 %v1363
    %1821 = vmatpush1.bf16.msra.mxu0 %v1362
    %1822 = vmatprep.subr.bf16.mxu0 %v1367
    %1823 = vmatpush1.bf16.msra.mxu0 %v1366
    %1824 = vmatprep.subr.bf16.mxu0 %v1371
    %1825 = vmatpush1.bf16.msra.mxu0 %v1370
    %1826 = vmatprep.subr.bf16.mxu0 %v1375
    %1827 = vmatpush1.bf16.msra.mxu0 %v1374
    %1828 = vmatprep.subr.bf16.mxu0 %v1379
    %1829 = vmatpush1.bf16.msra.mxu0 %v1378
    %1830 = vmatprep.subr.bf16.mxu0 %v1383
    %1831 = vmatpush1.bf16.msra.mxu0 %v1382
    %1832 = vmatprep.subr.bf16.mxu0 %v1387
    %1833 = vmatpush1.bf16.msra.mxu0 %v1386
    %1834 = vmatprep.subr.bf16.mxu0 %v1391
    %1835 = vmatpush1.bf16.msra.mxu0 %v1390
    %1836 = vmatprep.subr.bf16.mxu0 %v1395
    %1837 = vmatpush1.bf16.msra.mxu0 %v1394
    %1838 = vmatprep.subr.bf16.mxu0 %v1399
    %1839 = vmatpush1.bf16.msra.mxu0 %v1398
    %1840 = vmatprep.subr.bf16.mxu0 %v1403
    %1841 = vmatpush1.bf16.msra.mxu0 %v1402
    %1842 = vmatprep.subr.bf16.mxu0 %v1407
    %1843 = vmatpush1.bf16.msra.mxu0 %v1406
    %1844 = vmatprep.mubr.bf16.mxu0 %v169
    %1845 = vmatmul.mubr.bf16.gmra.mrb[0].mxu0 %v168
    %v1846 = vpop.f32.mrb[0].mxu0
    %v1847 = vadd.f32 %v1806, %v1846
    %v1848 = vpop.f32.mrb[0].mxu0
    %v1849 = vadd.f32 %v1808, %v1848
    %v1850 = vpop.f32.mrb[0].mxu0
    %v1851 = vpop.f32.mrb[0].mxu0
    %1852 = vdwg.mxu0
    %1853 = vmatprep.subr.bf16.mxu0 %v1411
    %1854 = vmatpush1.bf16.msra.mxu0 %v1410
    %1855 = vmatprep.subr.bf16.mxu0 %v1415
    %1856 = vmatpush1.bf16.msra.mxu0 %v1414
    %1857 = vmatprep.subr.bf16.mxu0 %v1419
    %1858 = vmatpush1.bf16.msra.mxu0 %v1418
    %1859 = vmatprep.subr.bf16.mxu0 %v1423
    %1860 = vmatpush1.bf16.msra.mxu0 %v1422
    %1861 = vmatprep.subr.bf16.mxu0 %v1427
    %1862 = vmatpush1.bf16.msra.mxu0 %v1426
    %1863 = vmatprep.subr.bf16.mxu0 %v1431
    %1864 = vmatpush1.bf16.msra.mxu0 %v1430
    %1865 = vmatprep.subr.bf16.mxu0 %v1435
    %1866 = vmatpush1.bf16.msra.mxu0 %v1434
    %1867 = vmatprep.subr.bf16.mxu0 %v1439
    %1868 = vmatpush1.bf16.msra.mxu0 %v1438
    %1869 = vmatprep.subr.bf16.mxu0 %v1443
    %1870 = vmatpush1.bf16.msra.mxu0 %v1442
    %1871 = vmatprep.subr.bf16.mxu0 %v1447
    %1872 = vmatpush1.bf16.msra.mxu0 %v1446
    %1873 = vmatprep.subr.bf16.mxu0 %v1451
    %1874 = vmatpush1.bf16.msra.mxu0 %v1450
    %1875 = vmatprep.subr.bf16.mxu0 %v1455
    %1876 = vmatpush1.bf16.msra.mxu0 %v1454
    %1877 = vmatprep.subr.bf16.mxu0 %v1459
    %1878 = vmatpush1.bf16.msra.mxu0 %v1458
    %1879 = vmatprep.subr.bf16.mxu0 %v1463
    %1880 = vmatpush1.bf16.msra.mxu0 %v1462
    %1881 = vmatprep.subr.bf16.mxu0 %v1467
    %1882 = vmatpush1.bf16.msra.mxu0 %v1466
    %1883 = vmatprep.subr.bf16.mxu0 %v1471
    %1884 = vmatpush1.bf16.msra.mxu0 %v1470
    %1885 = vmatprep.mubr.bf16.mxu0 %v171
    %1886 = vmatmul.mubr.bf16.gmra.mrb[0].mxu0 %v170
    %v1887 = vpop.f32.mrb[0].mxu0
    %v1888 = vadd.f32 %v1847, %v1887
    %v1889 = vpop.f32.mrb[0].mxu0
    %v1890 = vadd.f32 %v1849, %v1889
    %v1891 = vpop.f32.mrb[0].mxu0
    %v1892 = vpop.f32.mrb[0].mxu0
    %1893 = vdwg.mxu0
    %1894 = vmatprep.subr.bf16.mxu0 %v1221
    %1895 = vmatpush1.bf16.msra.mxu0 %v1220
    %1896 = vmatprep.subr.bf16.mxu0 %v1225
    %1897 = vmatpush1.bf16.msra.mxu0 %v1224
    %1898 = vmatprep.subr.bf16.mxu0 %v1229
    %1899 = vmatpush1.bf16.msra.mxu0 %v1228
    %1900 = vmatprep.subr.bf16.mxu0 %v1233
    %1901 = vmatpush1.bf16.msra.mxu0 %v1232
    %1902 = vmatprep.subr.bf16.mxu0 %v1237
    %1903 = vmatpush1.bf16.msra.mxu0 %v1236
    %1904 = vmatprep.subr.bf16.mxu0 %v1241
    %1905 = vmatpush1.bf16.msra.mxu0 %v1240
    %1906 = vmatprep.subr.bf16.mxu0 %v1245
    %1907 = vmatpush1.bf16.msra.mxu0 %v1244
    %1908 = vmatprep.subr.bf16.mxu0 %v1249
    %1909 = vmatpush1.bf16.msra.mxu0 %v1248
    %1910 = vmatprep.subr.bf16.mxu0 %v1253
    %1911 = vmatpush1.bf16.msra.mxu0 %v1252
    %1912 = vmatprep.subr.bf16.mxu0 %v1257
    %1913 = vmatpush1.bf16.msra.mxu0 %v1256
    %1914 = vmatprep.subr.bf16.mxu0 %v1261
    %1915 = vmatpush1.bf16.msra.mxu0 %v1260
    %1916 = vmatprep.subr.bf16.mxu0 %v1265
    %1917 = vmatpush1.bf16.msra.mxu0 %v1264
    %1918 = vmatprep.subr.bf16.mxu0 %v1269
    %1919 = vmatpush1.bf16.msra.mxu0 %v1268
    %1920 = vmatprep.subr.bf16.mxu0 %v1273
    %1921 = vmatpush1.bf16.msra.mxu0 %v1272
    %1922 = vmatprep.subr.bf16.mxu0 %v1277
    %1923 = vmatpush1.bf16.msra.mxu0 %v1276
    %1924 = vmatprep.subr.bf16.mxu0 %v1281
    %1925 = vmatpush1.bf16.msra.mxu0 %v1280
    %1926 = vmatprep.mubr.bf16.mxu0 %v165
    %1927 = vmatmul.mubr.bf16.gmra.mrb[0].mxu0 %v164
    %v1928 = vpop.f32.mrb[0].mxu0
    %v1929 = vadd.f32 %v441, %v1928
    %v1930 = vpop.f32.mrb[0].mxu0
    %v1931 = vadd.f32 %v445, %v1930
    %v1932 = vpop.f32.mrb[0].mxu0
    %v1933 = vpop.f32.mrb[0].mxu0
    %1934 = vdwg.mxu0
    %1935 = vmatprep.subr.bf16.mxu0 %v1285
    %1936 = vmatpush1.bf16.msra.mxu0 %v1284
    %1937 = vmatprep.subr.bf16.mxu0 %v1289
    %1938 = vmatpush1.bf16.msra.mxu0 %v1288
    %1939 = vmatprep.subr.bf16.mxu0 %v1293
    %1940 = vmatpush1.bf16.msra.mxu0 %v1292
    %1941 = vmatprep.subr.bf16.mxu0 %v1297
    %1942 = vmatpush1.bf16.msra.mxu0 %v1296
    %1943 = vmatprep.subr.bf16.mxu0 %v1301
    %1944 = vmatpush1.bf16.msra.mxu0 %v1300
    %1945 = vmatprep.subr.bf16.mxu0 %v1305
    %1946 = vmatpush1.bf16.msra.mxu0 %v1304
    %1947 = vmatprep.subr.bf16.mxu0 %v1309
    %1948 = vmatpush1.bf16.msra.mxu0 %v1308
    %1949 = vmatprep.subr.bf16.mxu0 %v1313
    %1950 = vmatpush1.bf16.msra.mxu0 %v1312
    %1951 = vmatprep.subr.bf16.mxu0 %v1317
    %1952 = vmatpush1.bf16.msra.mxu0 %v1316
    %1953 = vmatprep.subr.bf16.mxu0 %v1321
    %1954 = vmatpush1.bf16.msra.mxu0 %v1320
    %1955 = vmatprep.subr.bf16.mxu0 %v1325
    %1956 = vmatpush1.bf16.msra.mxu0 %v1324
    %1957 = vmatprep.subr.bf16.mxu0 %v1329
    %1958 = vmatpush1.bf16.msra.mxu0 %v1328
    %1959 = vmatprep.subr.bf16.mxu0 %v1333
    %1960 = vmatpush1.bf16.msra.mxu0 %v1332
    %1961 = vmatprep.subr.bf16.mxu0 %v1337
    %1962 = vmatpush1.bf16.msra.mxu0 %v1336
    %1963 = vmatprep.subr.bf16.mxu0 %v1341
    %1964 = vmatpush1.bf16.msra.mxu0 %v1340
    %1965 = vmatprep.subr.bf16.mxu0 %v1345
    %1966 = vmatpush1.bf16.msra.mxu0 %v1344
    %1967 = vmatprep.mubr.bf16.mxu0 %v167
    %1968 = vmatmul.mubr.bf16.gmra.mrb[0].mxu0 %v166
    %v1969 = vpop.f32.mrb[0].mxu0
    %v1970 = vadd.f32 %v1929, %v1969
    %v1971 = vpop.f32.mrb[0].mxu0
    %v1972 = vadd.f32 %v1931, %v1971
    %v1973 = vpop.f32.mrb[0].mxu0
    %v1974 = vpop.f32.mrb[0].mxu0
    %1975 = vdwg.mxu0
    %1976 = vmatprep.subr.bf16.mxu0 %v1349
    %1977 = vmatpush1.bf16.msra.mxu0 %v1348
    %1978 = vmatprep.subr.bf16.mxu0 %v1353
    %1979 = vmatpush1.bf16.msra.mxu0 %v1352
    %1980 = vmatprep.subr.bf16.mxu0 %v1357
    %1981 = vmatpush1.bf16.msra.mxu0 %v1356
    %1982 = vmatprep.subr.bf16.mxu0 %v1361
    %1983 = vmatpush1.bf16.msra.mxu0 %v1360
    %1984 = vmatprep.subr.bf16.mxu0 %v1365
    %1985 = vmatpush1.bf16.msra.mxu0 %v1364
    %1986 = vmatprep.subr.bf16.mxu0 %v1369
    %1987 = vmatpush1.bf16.msra.mxu0 %v1368
    %1988 = vmatprep.subr.bf16.mxu0 %v1373
    %1989 = vmatpush1.bf16.msra.mxu0 %v1372
    %1990 = vmatprep.subr.bf16.mxu0 %v1377
    %1991 = vmatpush1.bf16.msra.mxu0 %v1376
    %1992 = vmatprep.subr.bf16.mxu0 %v1381
    %1993 = vmatpush1.bf16.msra.mxu0 %v1380
    %1994 = vmatprep.subr.bf16.mxu0 %v1385
    %1995 = vmatpush1.bf16.msra.mxu0 %v1384
    %1996 = vmatprep.subr.bf16.mxu0 %v1389
    %1997 = vmatpush1.bf16.msra.mxu0 %v1388
    %1998 = vmatprep.subr.bf16.mxu0 %v1393
    %1999 = vmatpush1.bf16.msra.mxu0 %v1392
    %2000 = vmatprep.subr.bf16.mxu0 %v1397
    %2001 = vmatpush1.bf16.msra.mxu0 %v1396
    %2002 = vmatprep.subr.bf16.mxu0 %v1401
    %2003 = vmatpush1.bf16.msra.mxu0 %v1400
    %2004 = vmatprep.subr.bf16.mxu0 %v1405
    %2005 = vmatpush1.bf16.msra.mxu0 %v1404
    %2006 = vmatprep.subr.bf16.mxu0 %v1409
    %2007 = vmatpush1.bf16.msra.mxu0 %v1408
    %2008 = vmatprep.mubr.bf16.mxu0 %v169
    %2009 = vmatmul.mubr.bf16.gmra.mrb[0].mxu0 %v168
    %v2010 = vpop.f32.mrb[0].mxu0
    %v2011 = vadd.f32 %v1970, %v2010
    %v2012 = vpop.f32.mrb[0].mxu0
    %v2013 = vadd.f32 %v1972, %v2012
    %v2014 = vpop.f32.mrb[0].mxu0
    %v2015 = vpop.f32.mrb[0].mxu0
    %2016 = vdwg.mxu0
    %2017 = vmatprep.subr.bf16.mxu0 %v1413
    %2018 = vmatpush1.bf16.msra.mxu0 %v1412
    %2019 = vmatprep.subr.bf16.mxu0 %v1417
    %2020 = vmatpush1.bf16.msra.mxu0 %v1416
    %2021 = vmatprep.subr.bf16.mxu0 %v1421
    %2022 = vmatpush1.bf16.msra.mxu0 %v1420
    %2023 = vmatprep.subr.bf16.mxu0 %v1425
    %2024 = vmatpush1.bf16.msra.mxu0 %v1424
    %2025 = vmatprep.subr.bf16.mxu0 %v1429
    %2026 = vmatpush1.bf16.msra.mxu0 %v1428
    %2027 = vmatprep.subr.bf16.mxu0 %v1433
    %2028 = vmatpush1.bf16.msra.mxu0 %v1432
    %2029 = vmatprep.subr.bf16.mxu0 %v1437
    %2030 = vmatpush1.bf16.msra.mxu0 %v1436
    %2031 = vmatprep.subr.bf16.mxu0 %v1441
    %2032 = vmatpush1.bf16.msra.mxu0 %v1440
    %2033 = vmatprep.subr.bf16.mxu0 %v1445
    %2034 = vmatpush1.bf16.msra.mxu0 %v1444
    %2035 = vmatprep.subr.bf16.mxu0 %v1449
    %2036 = vmatpush1.bf16.msra.mxu0 %v1448
    %2037 = vmatprep.subr.bf16.mxu0 %v1453
    %2038 = vmatpush1.bf16.msra.mxu0 %v1452
    %2039 = vmatprep.subr.bf16.mxu0 %v1457
    %2040 = vmatpush1.bf16.msra.mxu0 %v1456
    %2041 = vmatprep.subr.bf16.mxu0 %v1461
    %2042 = vmatpush1.bf16.msra.mxu0 %v1460
    %2043 = vmatprep.subr.bf16.mxu0 %v1465
    %2044 = vmatpush1.bf16.msra.mxu0 %v1464
    %2045 = vmatprep.subr.bf16.mxu0 %v1469
    %2046 = vmatpush1.bf16.msra.mxu0 %v1468
    %2047 = vmatprep.subr.bf16.mxu0 %v1473
    %2048 = vmatpush1.bf16.msra.mxu0 %v1472
    %2049 = vmatprep.mubr.bf16.mxu0 %v171
    %2050 = vmatmul.mubr.bf16.gmra.mrb[0].mxu0 %v170
    %v2051 = vpop.f32.mrb[0].mxu0
    %v2052 = vadd.f32 %v2011, %v2051
    %v2053 = vpop.f32.mrb[0].mxu0
    %v2054 = vadd.f32 %v2013, %v2053
    %v2055 = vpop.f32.mrb[0].mxu0
    %v2056 = vpop.f32.mrb[0].mxu0
    %2057 = vdwg.mxu0
    %vm2058 = vcmask 1041408
    %v2059 = vsel %vm2058, %v1888, 0.0
    %v2060 = vrot.slane %v2059, 4
    %v2061 = vadd.f32 %v2059, %v2060
    %v2062 = vrot.slane %v2061, 2
    %v2063 = vadd.f32 %v2061, %v2062
    %v2064 = vrot.slane %v2063, 1
    %v2065 = vadd.f32 %v2063, %v2064
    %v2066 = vsel %vm2058, %v1890, 0.0
    %v2067 = vrot.slane %v2066, 4
    %v2068 = vadd.f32 %v2066, %v2067
    %v2069 = vrot.slane %v2068, 2
    %v2070 = vadd.f32 %v2068, %v2069
    %v2071 = vrot.slane %v2070, 1
    %v2072 = vadd.f32 %v2070, %v2071
    %v2073 = vsel %vm2058, %v2052, 0.0
    %v2074 = vrot.slane %v2073, 4
    %v2075 = vadd.f32 %v2073, %v2074
    %v2076 = vrot.slane %v2075, 2
    %v2077 = vadd.f32 %v2075, %v2076
    %v2078 = vrot.slane %v2077, 1
    %v2079 = vadd.f32 %v2077, %v2078
    %v2080 = vsel %vm2058, %v2054, 0.0
    %v2081 = vrot.slane %v2080, 4
    %v2082 = vadd.f32 %v2080, %v2081
    %v2083 = vrot.slane %v2082, 2
    %v2084 = vadd.f32 %v2082, %v2083
    %v2085 = vrot.slane %v2084, 1
    %v2086 = vadd.f32 %v2084, %v2085
    %v2087 = vmul.f32 %v2065, 0.5
    %v2088 = vmul.f32 %v2072, 0.5
    %v2089 = vmul.f32 %v2079, 0.5
    %v2090 = vmul.f32 %v2086, 0.5
    %v2091 = vmul.f32 %v1888, %v1888
    %v2092 = vmul.f32 %v1890, %v1890
    %v2093 = vmul.f32 %v2052, %v2052
    %v2094 = vmul.f32 %v2054, %v2054
    %v2095 = vsel %vm2058, %v2091, 0.0
    %v2096 = vrot.slane %v2095, 4
    %v2097 = vadd.f32 %v2095, %v2096
    %v2098 = vrot.slane %v2097, 2
    %v2099 = vadd.f32 %v2097, %v2098
    %v2100 = vrot.slane %v2099, 1
    %v2101 = vadd.f32 %v2099, %v2100
    %v2102 = vsel %vm2058, %v2092, 0.0
    %v2103 = vrot.slane %v2102, 4
    %v2104 = vadd.f32 %v2102, %v2103
    %v2105 = vrot.slane %v2104, 2
    %v2106 = vadd.f32 %v2104, %v2105
    %v2107 = vrot.slane %v2106, 1
    %v2108 = vadd.f32 %v2106, %v2107
    %v2109 = vsel %vm2058, %v2093, 0.0
    %v2110 = vrot.slane %v2109, 4
    %v2111 = vadd.f32 %v2109, %v2110
    %v2112 = vrot.slane %v2111, 2
    %v2113 = vadd.f32 %v2111, %v2112
    %v2114 = vrot.slane %v2113, 1
    %v2115 = vadd.f32 %v2113, %v2114
    %v2116 = vsel %vm2058, %v2094, 0.0
    %v2117 = vrot.slane %v2116, 4
    %v2118 = vadd.f32 %v2116, %v2117
    %v2119 = vrot.slane %v2118, 2
    %v2120 = vadd.f32 %v2118, %v2119
    %v2121 = vrot.slane %v2120, 1
    %v2122 = vadd.f32 %v2120, %v2121
    %v2123 = vmul.f32 %v2101, 0.5
    %v2124 = vmul.f32 %v2108, 0.5
    %v2125 = vmul.f32 %v2115, 0.5
    %v2126 = vmul.f32 %v2122, 0.5
    %v2127 = vmul.f32 %v2087, %v2087
    %v2128 = vmul.f32 %v2088, %v2088
    %v2129 = vmul.f32 %v2089, %v2089
    %v2130 = vmul.f32 %v2090, %v2090
    %v2131 = vsub.f32 %v2123, %v2127
    %v2132 = vsub.f32 %v2124, %v2128
    %v2133 = vsub.f32 %v2125, %v2129
    %v2134 = vsub.f32 %v2126, %v2130
    %v2135 = vmax.f32 %v2131, 0.0
    %v2136 = vmax.f32 %v2132, 0.0
    %v2137 = vmax.f32 %v2133, 0.0
    %v2138 = vmax.f32 %v2134, 0.0
    %v2139 = vsub.f32 %v1888, %v2087
    %v2140 = vsub.f32 %v1890, %v2088
    %v2141 = vsub.f32 %v2052, %v2089
    %v2142 = vsub.f32 %v2054, %v2090
    %v2143 = vadd.f32 %v2135, 1e-05
    %v2144 = vadd.f32 %v2136, 1e-05
    %v2145 = vadd.f32 %v2137, 1e-05
    %v2146 = vadd.f32 %v2138, 1e-05
    %v2147 = vrsqrt.pop %v2143
    %v2148 = vrsqrt.pop %v2144
    %v2149 = vrsqrt.pop %v2145
    %v2150 = vrsqrt.pop %v2146
    %v2151 = vmul.f32 %v2139, %v2147
    %v2152 = vmul.f32 %v2140, %v2148
    %v2153 = vmul.f32 %v2141, %v2149
    %v2154 = vmul.f32 %v2142, %v2150
    %v2155 = vld [vmem:[%s3] sm:$0xf]
    %v2157 = vlaneseq
    %v2158 = vshrl.u32 %v2157, 7
    %v2159 = vsub.s32 0, %v2158
    %v2160 = vrot.slane %v2155, %v2159
    %v2161 = vlaneseq
    %v2162 = vshrl.u32 %v2161, 7
    %v2163 = vsub.s32 1, %v2162
    %v2164 = vrot.slane %v2155, %v2163
    %v2165 = vlaneseq
    %v2166 = vshrl.u32 %v2165, 7
    %v2167 = vsub.s32 2, %v2166
    %v2168 = vrot.slane %v2155, %v2167
    %v2169 = vlaneseq
    %v2170 = vshrl.u32 %v2169, 7
    %v2171 = vsub.s32 3, %v2170
    %v2172 = vrot.slane %v2155, %v2171
    %v2177 = vmul.f32 %v2151, %v2160
    %v2178 = vmul.f32 %v2152, %v2164
    %v2179 = vmul.f32 %v2153, %v2168
    %v2180 = vmul.f32 %v2154, %v2172
    %v2181 = vld [vmem:[%s4] sm:$0xf]
    %v2183 = vlaneseq
    %v2184 = vshrl.u32 %v2183, 7
    %v2185 = vsub.s32 0, %v2184
    %v2186 = vrot.slane %v2181, %v2185
    %v2187 = vlaneseq
    %v2188 = vshrl.u32 %v2187, 7
    %v2189 = vsub.s32 1, %v2188
    %v2190 = vrot.slane %v2181, %v2189
    %v2191 = vlaneseq
    %v2192 = vshrl.u32 %v2191, 7
    %v2193 = vsub.s32 2, %v2192
    %v2194 = vrot.slane %v2181, %v2193
    %v2195 = vlaneseq
    %v2196 = vshrl.u32 %v2195, 7
    %v2197 = vsub.s32 3, %v2196
    %v2198 = vrot.slane %v2181, %v2197
    %v2203 = vadd.f32 %v2177, %v2186
    %v2204 = vadd.f32 %v2178, %v2190
    %v2205 = vadd.f32 %v2179, %v2194
    %v2206 = vadd.f32 %v2180, %v2198
    %v2207 = vmax.f32 %v2203, 0.0
    %v2208 = vmax.f32 %v2204, 0.0
    %v2209 = vmax.f32 %v2205, 0.0
    %v2210 = vmax.f32 %v2206, 0.0
    %v2211 = vpack.c.bf16 %v2207, %v2207
    %v2212 = vpack.c.bf16 %v2208, %v2208
    %v2213 = vpack.c.bf16 %v2209, %v2209
    %v2214 = vpack.c.bf16 %v2210, %v2210
    %v2215 = vld [vmem:[#allocation7] sm:$0xff]
    %v2216 = vld [vmem:[#allocation7 + $0x8] sm:$0xff]
    %v2217 = vld [vmem:[#allocation7 + $0x10] sm:$0xff]
    %v2218 = vld [vmem:[#allocation7 + $0x18] sm:$0xff]
    %v2219 = vld [vmem:[#allocation7 + $0x20] sm:$0xff]
    %v2220 = vld [vmem:[#allocation7 + $0x28] sm:$0xff]
    %v2221 = vld [vmem:[#allocation7 + $0x30] sm:$0xff]
    %v2222 = vld [vmem:[#allocation7 + $0x38] sm:$0xff]
    %v2223 = vld [vmem:[#allocation7 + $0x40] sm:$0xff]
    %v2224 = vld [vmem:[#allocation7 + $0x48] sm:$0xff]
    %v2225 = vld [vmem:[#allocation7 + $0x50] sm:$0xff]
    %v2226 = vld [vmem:[#allocation7 + $0x58] sm:$0xff]
    %v2227 = vld [vmem:[#allocation7 + $0x60] sm:$0xff]
    %v2228 = vld [vmem:[#allocation7 + $0x68] sm:$0xff]
    %v2229 = vld [vmem:[#allocation7 + $0x70] sm:$0xff]
    %v2230 = vld [vmem:[#allocation7 + $0x78] sm:$0xff]
    %v2231 = vld [vmem:[#allocation7 + $0x80] sm:$0xff]
    %v2232 = vld [vmem:[#allocation7 + $0x88] sm:$0xff]
    %v2233 = vld [vmem:[#allocation7 + $0x90] sm:$0xff]
    %v2234 = vld [vmem:[#allocation7 + $0x98] sm:$0xff]
    %v2235 = vld [vmem:[#allocation7 + $0xa0] sm:$0xff]
    %v2236 = vld [vmem:[#allocation7 + $0xa8] sm:$0xff]
    %v2237 = vld [vmem:[#allocation7 + $0xb0] sm:$0xff]
    %v2238 = vld [vmem:[#allocation7 + $0xb8] sm:$0xff]
    %v2239 = vld [vmem:[#allocation7 + $0xc0] sm:$0xff]
    %v2240 = vld [vmem:[#allocation7 + $0xc8] sm:$0xff]
    %v2241 = vld [vmem:[#allocation7 + $0xd0] sm:$0xff]
    %v2242 = vld [vmem:[#allocation7 + $0xd8] sm:$0xff]
    %v2243 = vld [vmem:[#allocation7 + $0xe0] sm:$0xff]
    %v2244 = vld [vmem:[#allocation7 + $0xe8] sm:$0xff]
    %v2245 = vld [vmem:[#allocation7 + $0xf0] sm:$0xff]
    %v2246 = vld [vmem:[#allocation7 + $0xf8] sm:$0xff]
    %v2247 = vld [vmem:[#allocation7 + $0x100] sm:$0xff]
    %v2248 = vld [vmem:[#allocation7 + $0x108] sm:$0xff]
    %v2249 = vld [vmem:[#allocation7 + $0x110] sm:$0xff]
    %v2250 = vld [vmem:[#allocation7 + $0x118] sm:$0xff]
    %v2251 = vld [vmem:[#allocation7 + $0x120] sm:$0xff]
    %v2252 = vld [vmem:[#allocation7 + $0x128] sm:$0xff]
    %v2253 = vld [vmem:[#allocation7 + $0x130] sm:$0xff]
    %v2254 = vld [vmem:[#allocation7 + $0x138] sm:$0xff]
    %v2255 = vld [vmem:[#allocation7 + $0x140] sm:$0xff]
    %v2256 = vld [vmem:[#allocation7 + $0x148] sm:$0xff]
    %v2257 = vld [vmem:[#allocation7 + $0x150] sm:$0xff]
    %v2258 = vld [vmem:[#allocation7 + $0x158] sm:$0xff]
    %v2259 = vld [vmem:[#allocation7 + $0x160] sm:$0xff]
    %v2260 = vld [vmem:[#allocation7 + $0x168] sm:$0xff]
    %v2261 = vld [vmem:[#allocation7 + $0x170] sm:$0xff]
    %v2262 = vld [vmem:[#allocation7 + $0x178] sm:$0xff]
    %v2263 = vld [vmem:[#allocation7 + $0x180] sm:$0xff]
    %v2264 = vld [vmem:[#allocation7 + $0x188] sm:$0xff]
    %v2265 = vld [vmem:[#allocation7 + $0x190] sm:$0xff]
    %v2266 = vld [vmem:[#allocation7 + $0x198] sm:$0xff]
    %v2267 = vld [vmem:[#allocation7 + $0x1a0] sm:$0xff]
    %v2268 = vld [vmem:[#allocation7 + $0x1a8] sm:$0xff]
    %v2269 = vld [vmem:[#allocation7 + $0x1b0] sm:$0xff]
    %v2270 = vld [vmem:[#allocation7 + $0x1b8] sm:$0xff]
    %v2271 = vld [vmem:[#allocation7 + $0x1c0] sm:$0xff]
    %v2272 = vld [vmem:[#allocation7 + $0x1c8] sm:$0xff]
    %v2273 = vld [vmem:[#allocation7 + $0x1d0] sm:$0xff]
    %v2274 = vld [vmem:[#allocation7 + $0x1d8] sm:$0xff]
    %v2275 = vld [vmem:[#allocation7 + $0x1e0] sm:$0xff]
    %v2276 = vld [vmem:[#allocation7 + $0x1e8] sm:$0xff]
    %v2277 = vld [vmem:[#allocation7 + $0x1f0] sm:$0xff]
    %v2278 = vld [vmem:[#allocation7 + $0x1f8] sm:$0xff]
    %v2279 = vld [vmem:[%s6] sm:$0x3]
    %v2281 = vlaneseq
    %v2282 = vshrl.u32 %v2281, 7
    %v2283 = vsub.s32 0, %v2282
    %v2284 = vrot.slane %v2279, %v2283
    %v2285 = vlaneseq
    %v2286 = vshrl.u32 %v2285, 7
    %v2287 = vsub.s32 1, %v2286
    %v2288 = vrot.slane %v2279, %v2287
    %v2355 = vunpack.c.l.b16 %v2215
    %v2356 = vunpack.c.h.b16 %v2215
    %v2357 = vunpack.c.l.b16 %v2216
    %v2358 = vunpack.c.h.b16 %v2216
    %v2359 = vunpack.c.l.b16 %v2217
    %v2360 = vunpack.c.h.b16 %v2217
    %v2361 = vunpack.c.l.b16 %v2218
    %v2362 = vunpack.c.h.b16 %v2218
    %v2363 = vunpack.c.l.b16 %v2219
    %v2364 = vunpack.c.h.b16 %v2219
    %v2365 = vunpack.c.l.b16 %v2220
    %v2366 = vunpack.c.h.b16 %v2220
    %v2367 = vunpack.c.l.b16 %v2221
    %v2368 = vunpack.c.h.b16 %v2221
    %v2369 = vunpack.c.l.b16 %v2222
    %v2370 = vunpack.c.h.b16 %v2222
    %v2371 = vunpack.c.l.b16 %v2223
    %v2372 = vunpack.c.h.b16 %v2223
    %v2373 = vunpack.c.l.b16 %v2224
    %v2374 = vunpack.c.h.b16 %v2224
    %v2375 = vunpack.c.l.b16 %v2225
    %v2376 = vunpack.c.h.b16 %v2225
    %v2377 = vunpack.c.l.b16 %v2226
    %v2378 = vunpack.c.h.b16 %v2226
    %v2379 = vunpack.c.l.b16 %v2227
    %v2380 = vunpack.c.h.b16 %v2227
    %v2381 = vunpack.c.l.b16 %v2228
    %v2382 = vunpack.c.h.b16 %v2228
    %v2383 = vunpack.c.l.b16 %v2229
    %v2384 = vunpack.c.h.b16 %v2229
    %v2385 = vunpack.c.l.b16 %v2230
    %v2386 = vunpack.c.h.b16 %v2230
    %v2387 = vunpack.c.l.b16 %v2231
    %v2388 = vunpack.c.h.b16 %v2231
    %v2389 = vunpack.c.l.b16 %v2232
    %v2390 = vunpack.c.h.b16 %v2232
    %v2391 = vunpack.c.l.b16 %v2233
    %v2392 = vunpack.c.h.b16 %v2233
    %v2393 = vunpack.c.l.b16 %v2234
    %v2394 = vunpack.c.h.b16 %v2234
    %v2395 = vunpack.c.l.b16 %v2235
    %v2396 = vunpack.c.h.b16 %v2235
    %v2397 = vunpack.c.l.b16 %v2236
    %v2398 = vunpack.c.h.b16 %v2236
    %v2399 = vunpack.c.l.b16 %v2237
    %v2400 = vunpack.c.h.b16 %v2237
    %v2401 = vunpack.c.l.b16 %v2238
    %v2402 = vunpack.c.h.b16 %v2238
    %v2403 = vunpack.c.l.b16 %v2239
    %v2404 = vunpack.c.h.b16 %v2239
    %v2405 = vunpack.c.l.b16 %v2240
    %v2406 = vunpack.c.h.b16 %v2240
    %v2407 = vunpack.c.l.b16 %v2241
    %v2408 = vunpack.c.h.b16 %v2241
    %v2409 = vunpack.c.l.b16 %v2242
    %v2410 = vunpack.c.h.b16 %v2242
    %v2411 = vunpack.c.l.b16 %v2243
    %v2412 = vunpack.c.h.b16 %v2243
    %v2413 = vunpack.c.l.b16 %v2244
    %v2414 = vunpack.c.h.b16 %v2244
    %v2415 = vunpack.c.l.b16 %v2245
    %v2416 = vunpack.c.h.b16 %v2245
    %v2417 = vunpack.c.l.b16 %v2246
    %v2418 = vunpack.c.h.b16 %v2246
    %v2419 = vunpack.c.l.b16 %v2247
    %v2420 = vunpack.c.h.b16 %v2247
    %v2421 = vunpack.c.l.b16 %v2248
    %v2422 = vunpack.c.h.b16 %v2248
    %v2423 = vunpack.c.l.b16 %v2249
    %v2424 = vunpack.c.h.b16 %v2249
    %v2425 = vunpack.c.l.b16 %v2250
    %v2426 = vunpack.c.h.b16 %v2250
    %v2427 = vunpack.c.l.b16 %v2251
    %v2428 = vunpack.c.h.b16 %v2251
    %v2429 = vunpack.c.l.b16 %v2252
    %v2430 = vunpack.c.h.b16 %v2252
    %v2431 = vunpack.c.l.b16 %v2253
    %v2432 = vunpack.c.h.b16 %v2253
    %v2433 = vunpack.c.l.b16 %v2254
    %v2434 = vunpack.c.h.b16 %v2254
    %v2435 = vunpack.c.l.b16 %v2255
    %v2436 = vunpack.c.h.b16 %v2255
    %v2437 = vunpack.c.l.b16 %v2256
    %v2438 = vunpack.c.h.b16 %v2256
    %v2439 = vunpack.c.l.b16 %v2257
    %v2440 = vunpack.c.h.b16 %v2257
    %v2441 = vunpack.c.l.b16 %v2258
    %v2442 = vunpack.c.h.b16 %v2258
    %v2443 = vunpack.c.l.b16 %v2259
    %v2444 = vunpack.c.h.b16 %v2259
    %v2445 = vunpack.c.l.b16 %v2260
    %v2446 = vunpack.c.h.b16 %v2260
    %v2447 = vunpack.c.l.b16 %v2261
    %v2448 = vunpack.c.h.b16 %v2261
    %v2449 = vunpack.c.l.b16 %v2262
    %v2450 = vunpack.c.h.b16 %v2262
    %v2451 = vunpack.c.l.b16 %v2263
    %v2452 = vunpack.c.h.b16 %v2263
    %v2453 = vunpack.c.l.b16 %v2264
    %v2454 = vunpack.c.h.b16 %v2264
    %v2455 = vunpack.c.l.b16 %v2265
    %v2456 = vunpack.c.h.b16 %v2265
    %v2457 = vunpack.c.l.b16 %v2266
    %v2458 = vunpack.c.h.b16 %v2266
    %v2459 = vunpack.c.l.b16 %v2267
    %v2460 = vunpack.c.h.b16 %v2267
    %v2461 = vunpack.c.l.b16 %v2268
    %v2462 = vunpack.c.h.b16 %v2268
    %v2463 = vunpack.c.l.b16 %v2269
    %v2464 = vunpack.c.h.b16 %v2269
    %v2465 = vunpack.c.l.b16 %v2270
    %v2466 = vunpack.c.h.b16 %v2270
    %v2467 = vunpack.c.l.b16 %v2271
    %v2468 = vunpack.c.h.b16 %v2271
    %v2469 = vunpack.c.l.b16 %v2272
    %v2470 = vunpack.c.h.b16 %v2272
    %v2471 = vunpack.c.l.b16 %v2273
    %v2472 = vunpack.c.h.b16 %v2273
    %v2473 = vunpack.c.l.b16 %v2274
    %v2474 = vunpack.c.h.b16 %v2274
    %v2475 = vunpack.c.l.b16 %v2275
    %v2476 = vunpack.c.h.b16 %v2275
    %v2477 = vunpack.c.l.b16 %v2276
    %v2478 = vunpack.c.h.b16 %v2276
    %v2479 = vunpack.c.l.b16 %v2277
    %v2480 = vunpack.c.h.b16 %v2277
    %v2481 = vunpack.c.l.b16 %v2278
    %v2482 = vunpack.c.h.b16 %v2278
    %v2483 = vpack.c.b16 %v2357, %v2355
    %v2484 = vpack.c.b16 %v2358, %v2356
    %v2485 = vpack.c.b16 %v2361, %v2359
    %v2486 = vpack.c.b16 %v2362, %v2360
    %v2487 = vpack.c.b16 %v2365, %v2363
    %v2488 = vpack.c.b16 %v2366, %v2364
    %v2489 = vpack.c.b16 %v2369, %v2367
    %v2490 = vpack.c.b16 %v2370, %v2368
    %v2491 = vpack.c.b16 %v2373, %v2371
    %v2492 = vpack.c.b16 %v2374, %v2372
    %v2493 = vpack.c.b16 %v2377, %v2375
    %v2494 = vpack.c.b16 %v2378, %v2376
    %v2495 = vpack.c.b16 %v2381, %v2379
    %v2496 = vpack.c.b16 %v2382, %v2380
    %v2497 = vpack.c.b16 %v2385, %v2383
    %v2498 = vpack.c.b16 %v2386, %v2384
    %v2499 = vpack.c.b16 %v2389, %v2387
    %v2500 = vpack.c.b16 %v2390, %v2388
    %v2501 = vpack.c.b16 %v2393, %v2391
    %v2502 = vpack.c.b16 %v2394, %v2392
    %v2503 = vpack.c.b16 %v2397, %v2395
    %v2504 = vpack.c.b16 %v2398, %v2396
    %v2505 = vpack.c.b16 %v2401, %v2399
    %v2506 = vpack.c.b16 %v2402, %v2400
    %v2507 = vpack.c.b16 %v2405, %v2403
    %v2508 = vpack.c.b16 %v2406, %v2404
    %v2509 = vpack.c.b16 %v2409, %v2407
    %v2510 = vpack.c.b16 %v2410, %v2408
    %v2511 = vpack.c.b16 %v2413, %v2411
    %v2512 = vpack.c.b16 %v2414, %v2412
    %v2513 = vpack.c.b16 %v2417, %v2415
    %v2514 = vpack.c.b16 %v2418, %v2416
    %v2515 = vpack.c.b16 %v2421, %v2419
    %v2516 = vpack.c.b16 %v2422, %v2420
    %v2517 = vpack.c.b16 %v2425, %v2423
    %v2518 = vpack.c.b16 %v2426, %v2424
    %v2519 = vpack.c.b16 %v2429, %v2427
    %v2520 = vpack.c.b16 %v2430, %v2428
    %v2521 = vpack.c.b16 %v2433, %v2431
    %v2522 = vpack.c.b16 %v2434, %v2432
    %v2523 = vpack.c.b16 %v2437, %v2435
    %v2524 = vpack.c.b16 %v2438, %v2436
    %v2525 = vpack.c.b16 %v2441, %v2439
    %v2526 = vpack.c.b16 %v2442, %v2440
    %v2527 = vpack.c.b16 %v2445, %v2443
    %v2528 = vpack.c.b16 %v2446, %v2444
    %v2529 = vpack.c.b16 %v2449, %v2447
    %v2530 = vpack.c.b16 %v2450, %v2448
    %v2531 = vpack.c.b16 %v2453, %v2451
    %v2532 = vpack.c.b16 %v2454, %v2452
    %v2533 = vpack.c.b16 %v2457, %v2455
    %v2534 = vpack.c.b16 %v2458, %v2456
    %v2535 = vpack.c.b16 %v2461, %v2459
    %v2536 = vpack.c.b16 %v2462, %v2460
    %v2537 = vpack.c.b16 %v2465, %v2463
    %v2538 = vpack.c.b16 %v2466, %v2464
    %v2539 = vpack.c.b16 %v2469, %v2467
    %v2540 = vpack.c.b16 %v2470, %v2468
    %v2541 = vpack.c.b16 %v2473, %v2471
    %v2542 = vpack.c.b16 %v2474, %v2472
    %v2543 = vpack.c.b16 %v2477, %v2475
    %v2544 = vpack.c.b16 %v2478, %v2476
    %v2545 = vpack.c.b16 %v2481, %v2479
    %v2546 = vpack.c.b16 %v2482, %v2480
    %2611 = vmatprep.subr.bf16.mxu0 %v2484
    %2612 = vmatpush1.bf16.msra.mxu0 %v2483
    %2613 = vmatprep.subr.bf16.mxu0 %v2486
    %2614 = vmatpush1.bf16.msra.mxu0 %v2485
    %2615 = vmatprep.subr.bf16.mxu0 %v2488
    %2616 = vmatpush1.bf16.msra.mxu0 %v2487
    %2617 = vmatprep.subr.bf16.mxu0 %v2490
    %2618 = vmatpush1.bf16.msra.mxu0 %v2489
    %2619 = vmatprep.subr.bf16.mxu0 %v2492
    %2620 = vmatpush1.bf16.msra.mxu0 %v2491
    %2621 = vmatprep.subr.bf16.mxu0 %v2494
    %2622 = vmatpush1.bf16.msra.mxu0 %v2493
    %2623 = vmatprep.subr.bf16.mxu0 %v2496
    %2624 = vmatpush1.bf16.msra.mxu0 %v2495
    %2625 = vmatprep.subr.bf16.mxu0 %v2498
    %2626 = vmatpush1.bf16.msra.mxu0 %v2497
    %2627 = vmatprep.subr.bf16.mxu0 %v2500
    %2628 = vmatpush1.bf16.msra.mxu0 %v2499
    %2629 = vmatprep.subr.bf16.mxu0 %v2502
    %2630 = vmatpush1.bf16.msra.mxu0 %v2501
    %2631 = vmatprep.subr.bf16.mxu0 %v2504
    %2632 = vmatpush1.bf16.msra.mxu0 %v2503
    %2633 = vmatprep.subr.bf16.mxu0 %v2506
    %2634 = vmatpush1.bf16.msra.mxu0 %v2505
    %2635 = vmatprep.subr.bf16.mxu0 %v2508
    %2636 = vmatpush1.bf16.msra.mxu0 %v2507
    %2637 = vmatprep.subr.bf16.mxu0 %v2510
    %2638 = vmatpush1.bf16.msra.mxu0 %v2509
    %2639 = vmatprep.subr.bf16.mxu0 %v2512
    %2640 = vmatpush1.bf16.msra.mxu0 %v2511
    %2641 = vmatprep.subr.bf16.mxu0 %v2514
    %2642 = vmatpush1.bf16.msra.mxu0 %v2513
    %2643 = vmatprep.mubr.bf16.mxu0 %v2212
    %2644 = vmatmul.mubr.bf16.gmra.mrb[0].mxu0 %v2211
    %v2645 = vpop.f32.mrb[0].mxu0
    %v2646 = vadd.f32 %v2284, %v2645
    %v2647 = vpop.f32.mrb[0].mxu0
    %v2648 = vadd.f32 %v2288, %v2647
    %v2649 = vpop.f32.mrb[0].mxu0
    %v2650 = vpop.f32.mrb[0].mxu0
    %2651 = vdwg.mxu0
    %2652 = vmatprep.subr.bf16.mxu0 %v2516
    %2653 = vmatpush1.bf16.msra.mxu0 %v2515
    %2654 = vmatprep.subr.bf16.mxu0 %v2518
    %2655 = vmatpush1.bf16.msra.mxu0 %v2517
    %2656 = vmatprep.subr.bf16.mxu0 %v2520
    %2657 = vmatpush1.bf16.msra.mxu0 %v2519
    %2658 = vmatprep.subr.bf16.mxu0 %v2522
    %2659 = vmatpush1.bf16.msra.mxu0 %v2521
    %2660 = vmatprep.subr.bf16.mxu0 %v2524
    %2661 = vmatpush1.bf16.msra.mxu0 %v2523
    %2662 = vmatprep.subr.bf16.mxu0 %v2526
    %2663 = vmatpush1.bf16.msra.mxu0 %v2525
    %2664 = vmatprep.subr.bf16.mxu0 %v2528
    %2665 = vmatpush1.bf16.msra.mxu0 %v2527
    %2666 = vmatprep.subr.bf16.mxu0 %v2530
    %2667 = vmatpush1.bf16.msra.mxu0 %v2529
    %2668 = vmatprep.subr.bf16.mxu0 %v2532
    %2669 = vmatpush1.bf16.msra.mxu0 %v2531
    %2670 = vmatprep.subr.bf16.mxu0 %v2534
    %2671 = vmatpush1.bf16.msra.mxu0 %v2533
    %2672 = vmatprep.subr.bf16.mxu0 %v2536
    %2673 = vmatpush1.bf16.msra.mxu0 %v2535
    %2674 = vmatprep.subr.bf16.mxu0 %v2538
    %2675 = vmatpush1.bf16.msra.mxu0 %v2537
    %2676 = vmatprep.subr.bf16.mxu0 %v2540
    %2677 = vmatpush1.bf16.msra.mxu0 %v2539
    %2678 = vmatprep.subr.bf16.mxu0 %v2542
    %2679 = vmatpush1.bf16.msra.mxu0 %v2541
    %2680 = vmatprep.subr.bf16.mxu0 %v2544
    %2681 = vmatpush1.bf16.msra.mxu0 %v2543
    %2682 = vmatprep.subr.bf16.mxu0 %v2546
    %2683 = vmatpush1.bf16.msra.mxu0 %v2545
    %2684 = vmatprep.mubr.bf16.mxu0 %v2214
    %2685 = vmatmul.mubr.bf16.gmra.mrb[0].mxu0 %v2213
    %v2686 = vpop.f32.mrb[0].mxu0
    %v2687 = vadd.f32 %v2646, %v2686
    %v2688 = vpop.f32.mrb[0].mxu0
    %v2689 = vadd.f32 %v2648, %v2688
    %v2690 = vpop.f32.mrb[0].mxu0
    %v2691 = vpop.f32.mrb[0].mxu0
    %2692 = vdwg.mxu0
    %v2693 = vsel %vm2058, %v2687, 0.0
    %v2694 = vrot.slane %v2693, 4
    %v2695 = vadd.f32 %v2693, %v2694
    %v2696 = vrot.slane %v2695, 2
    %v2697 = vadd.f32 %v2695, %v2696
    %v2698 = vrot.slane %v2697, 1
    %v2699 = vadd.f32 %v2697, %v2698
    %v2700 = vsel %vm2058, %v2689, 0.0
    %v2701 = vrot.slane %v2700, 4
    %v2702 = vadd.f32 %v2700, %v2701
    %v2703 = vrot.slane %v2702, 2
    %v2704 = vadd.f32 %v2702, %v2703
    %v2705 = vrot.slane %v2704, 1
    %v2706 = vadd.f32 %v2704, %v2705
    %v2707 = vmul.f32 %v2699, 0.5
    %v2708 = vmul.f32 %v2706, 0.5
    %v2709 = vmul.f32 %v2687, %v2687
    %v2710 = vmul.f32 %v2689, %v2689
    %v2711 = vsel %vm2058, %v2709, 0.0
    %v2712 = vrot.slane %v2711, 4
    %v2713 = vadd.f32 %v2711, %v2712
    %v2714 = vrot.slane %v2713, 2
    %v2715 = vadd.f32 %v2713, %v2714
    %v2716 = vrot.slane %v2715, 1
    %v2717 = vadd.f32 %v2715, %v2716
    %v2718 = vsel %vm2058, %v2710, 0.0
    %v2719 = vrot.slane %v2718, 4
    %v2720 = vadd.f32 %v2718, %v2719
    %v2721 = vrot.slane %v2720, 2
    %v2722 = vadd.f32 %v2720, %v2721
    %v2723 = vrot.slane %v2722, 1
    %v2724 = vadd.f32 %v2722, %v2723
    %v2725 = vmul.f32 %v2717, 0.5
    %v2726 = vmul.f32 %v2724, 0.5
    %v2727 = vmul.f32 %v2707, %v2707
    %v2728 = vmul.f32 %v2708, %v2708
    %v2729 = vsub.f32 %v2725, %v2727
    %v2730 = vsub.f32 %v2726, %v2728
    %v2731 = vmax.f32 %v2729, 0.0
    %v2732 = vmax.f32 %v2730, 0.0
    %v2733 = vsub.f32 %v2687, %v2707
    %v2734 = vsub.f32 %v2689, %v2708
    %v2735 = vadd.f32 %v2731, 1e-05
    %v2736 = vadd.f32 %v2732, 1e-05
    %v2737 = vrsqrt.pop %v2735
    %v2738 = vrsqrt.pop %v2736
    %v2739 = vmul.f32 %v2733, %v2737
    %v2740 = vmul.f32 %v2734, %v2738
    %v2741 = vld [vmem:[%s7] sm:$0x3]
    %v2743 = vlaneseq
    %v2744 = vshrl.u32 %v2743, 7
    %v2745 = vsub.s32 0, %v2744
    %v2746 = vrot.slane %v2741, %v2745
    %v2747 = vlaneseq
    %v2748 = vshrl.u32 %v2747, 7
    %v2749 = vsub.s32 1, %v2748
    %v2750 = vrot.slane %v2741, %v2749
    %v2753 = vmul.f32 %v2739, %v2746
    %v2754 = vmul.f32 %v2740, %v2750
    %v2755 = vld [vmem:[%s8] sm:$0x3]
    %v2757 = vlaneseq
    %v2758 = vshrl.u32 %v2757, 7
    %v2759 = vsub.s32 0, %v2758
    %v2760 = vrot.slane %v2755, %v2759
    %v2761 = vlaneseq
    %v2762 = vshrl.u32 %v2761, 7
    %v2763 = vsub.s32 1, %v2762
    %v2764 = vrot.slane %v2755, %v2763
    %v2767 = vadd.f32 %v2753, %v2760
    %v2768 = vadd.f32 %v2754, %v2764
    %v2769 = vmax.f32 %v2767, 0.0
    %v2770 = vmax.f32 %v2768, 0.0
    %v2771 = vpack.c.bf16 %v2769, %v2769
    %v2772 = vpack.c.bf16 %v2770, %v2770
    %v2773 = vld [vmem:[#allocation8] sm:$0xf]
    %v2774 = vld [vmem:[#allocation8 + $0x4] sm:$0xf]
    %v2775 = vld [vmem:[#allocation8 + $0x8] sm:$0xf]
    %v2776 = vld [vmem:[#allocation8 + $0xc] sm:$0xf]
    %v2777 = vld [vmem:[#allocation8 + $0x10] sm:$0xf]
    %v2778 = vld [vmem:[#allocation8 + $0x14] sm:$0xf]
    %v2779 = vld [vmem:[#allocation8 + $0x18] sm:$0xf]
    %v2780 = vld [vmem:[#allocation8 + $0x1c] sm:$0xf]
    %v2781 = vld [vmem:[#allocation8 + $0x20] sm:$0xf]
    %v2782 = vld [vmem:[#allocation8 + $0x24] sm:$0xf]
    %v2783 = vld [vmem:[#allocation8 + $0x28] sm:$0xf]
    %v2784 = vld [vmem:[#allocation8 + $0x2c] sm:$0xf]
    %v2785 = vld [vmem:[#allocation8 + $0x30] sm:$0xf]
    %v2786 = vld [vmem:[#allocation8 + $0x34] sm:$0xf]
    %v2787 = vld [vmem:[#allocation8 + $0x38] sm:$0xf]
    %v2788 = vld [vmem:[#allocation8 + $0x3c] sm:$0xf]
    %v2789 = vld [vmem:[#allocation8 + $0x40] sm:$0xf]
    %v2790 = vld [vmem:[#allocation8 + $0x44] sm:$0xf]
    %v2791 = vld [vmem:[#allocation8 + $0x48] sm:$0xf]
    %v2792 = vld [vmem:[#allocation8 + $0x4c] sm:$0xf]
    %v2793 = vld [vmem:[#allocation8 + $0x50] sm:$0xf]
    %v2794 = vld [vmem:[#allocation8 + $0x54] sm:$0xf]
    %v2795 = vld [vmem:[#allocation8 + $0x58] sm:$0xf]
    %v2796 = vld [vmem:[#allocation8 + $0x5c] sm:$0xf]
    %v2797 = vld [vmem:[#allocation8 + $0x60] sm:$0xf]
    %v2798 = vld [vmem:[#allocation8 + $0x64] sm:$0xf]
    %v2799 = vld [vmem:[#allocation8 + $0x68] sm:$0xf]
    %v2800 = vld [vmem:[#allocation8 + $0x6c] sm:$0xf]
    %v2801 = vld [vmem:[#allocation8 + $0x70] sm:$0xf]
    %v2802 = vld [vmem:[#allocation8 + $0x74] sm:$0xf]
    %v2803 = vld [vmem:[#allocation8 + $0x78] sm:$0xf]
    %v2804 = vld [vmem:[#allocation8 + $0x7c] sm:$0xf]
    %v2805 = vld [vmem:[%s10] sm:$0x1]
    %v2807 = vlaneseq
    %v2808 = vshrl.u32 %v2807, 7
    %v2809 = vsub.s32 0, %v2808
    %v2810 = vrot.slane %v2805, %v2809
    %v2844 = vunpack.c.l.b16 %v2773
    %v2845 = vunpack.c.l.b16 %v2774
    %v2846 = vunpack.c.l.b16 %v2775
    %v2847 = vunpack.c.l.b16 %v2776
    %v2848 = vunpack.c.l.b16 %v2777
    %v2849 = vunpack.c.l.b16 %v2778
    %v2850 = vunpack.c.l.b16 %v2779
    %v2851 = vunpack.c.l.b16 %v2780
    %v2852 = vunpack.c.l.b16 %v2781
    %v2853 = vunpack.c.l.b16 %v2782
    %v2854 = vunpack.c.l.b16 %v2783
    %v2855 = vunpack.c.l.b16 %v2784
    %v2856 = vunpack.c.l.b16 %v2785
    %v2857 = vunpack.c.l.b16 %v2786
    %v2858 = vunpack.c.l.b16 %v2787
    %v2859 = vunpack.c.l.b16 %v2788
    %v2860 = vunpack.c.l.b16 %v2789
    %v2861 = vunpack.c.l.b16 %v2790
    %v2862 = vunpack.c.l.b16 %v2791
    %v2863 = vunpack.c.l.b16 %v2792
    %v2864 = vunpack.c.l.b16 %v2793
    %v2865 = vunpack.c.l.b16 %v2794
    %v2866 = vunpack.c.l.b16 %v2795
    %v2867 = vunpack.c.l.b16 %v2796
    %v2868 = vunpack.c.l.b16 %v2797
    %v2869 = vunpack.c.l.b16 %v2798
    %v2870 = vunpack.c.l.b16 %v2799
    %v2871 = vunpack.c.l.b16 %v2800
    %v2872 = vunpack.c.l.b16 %v2801
    %v2873 = vunpack.c.l.b16 %v2802
    %v2874 = vunpack.c.l.b16 %v2803
    %v2875 = vunpack.c.l.b16 %v2804
    %v2876 = vpack.c.b16 %v2845, %v2844
    %v2877 = vpack.c.b16 %v2847, %v2846
    %v2878 = vpack.c.b16 %v2849, %v2848
    %v2879 = vpack.c.b16 %v2851, %v2850
    %v2880 = vpack.c.b16 %v2853, %v2852
    %v2881 = vpack.c.b16 %v2855, %v2854
    %v2882 = vpack.c.b16 %v2857, %v2856
    %v2883 = vpack.c.b16 %v2859, %v2858
    %v2884 = vpack.c.b16 %v2861, %v2860
    %v2885 = vpack.c.b16 %v2863, %v2862
    %v2886 = vpack.c.b16 %v2865, %v2864
    %v2887 = vpack.c.b16 %v2867, %v2866
    %v2888 = vpack.c.b16 %v2869, %v2868
    %v2889 = vpack.c.b16 %v2871, %v2870
    %v2890 = vpack.c.b16 %v2873, %v2872
    %v2891 = vpack.c.b16 %v2875, %v2874
    %2908 = vmatprep.subr.bf16.mxu0 0
    %2909 = vmatpush1.bf16.msra.mxu0 %v2876
    %2910 = vmatprep.subr.bf16.mxu0 0
    %2911 = vmatpush1.bf16.msra.mxu0 %v2877
    %2912 = vmatprep.subr.bf16.mxu0 0
    %2913 = vmatpush1.bf16.msra.mxu0 %v2878
    %2914 = vmatprep.subr.bf16.mxu0 0
    %2915 = vmatpush1.bf16.msra.mxu0 %v2879
    %2916 = vmatprep.subr.bf16.mxu0 0
    %2917 = vmatpush1.bf16.msra.mxu0 %v2880
    %2918 = vmatprep.subr.bf16.mxu0 0
    %2919 = vmatpush1.bf16.msra.mxu0 %v2881
    %2920 = vmatprep.subr.bf16.mxu0 0
    %2921 = vmatpush1.bf16.msra.mxu0 %v2882
    %2922 = vmatprep.subr.bf16.mxu0 0
    %2923 = vmatpush1.bf16.msra.mxu0 %v2883
    %2924 = vmatprep.subr.bf16.mxu0 0
    %2925 = vmatpush1.bf16.msra.mxu0 %v2884
    %2926 = vmatprep.subr.bf16.mxu0 0
    %2927 = vmatpush1.bf16.msra.mxu0 %v2885
    %2928 = vmatprep.subr.bf16.mxu0 0
    %2929 = vmatpush1.bf16.msra.mxu0 %v2886
    %2930 = vmatprep.subr.bf16.mxu0 0
    %2931 = vmatpush1.bf16.msra.mxu0 %v2887
    %2932 = vmatprep.subr.bf16.mxu0 0
    %2933 = vmatpush1.bf16.msra.mxu0 %v2888
    %2934 = vmatprep.subr.bf16.mxu0 0
    %2935 = vmatpush1.bf16.msra.mxu0 %v2889
    %2936 = vmatprep.subr.bf16.mxu0 0
    %2937 = vmatpush1.bf16.msra.mxu0 %v2890
    %2938 = vmatprep.subr.bf16.mxu0 0
    %2939 = vmatpush1.bf16.msra.mxu0 %v2891
    %2940 = vmatprep.mubr.bf16.mxu0 %v2772
    %2941 = vmatmul.mubr.bf16.gmra.mrb[0].mxu0 %v2771
    %v2942 = vpop.f32.mrb[0].mxu0
    %v2943 = vadd.f32 %v2810, %v2942
    %v2944 = vpop.f32.mrb[0].mxu0
    %v2945 = vpop.f32.mrb[0].mxu0
    %v2946 = vpop.f32.mrb[0].mxu0
    %2947 = vdwg.mxu0
    %v2948 = vsel %vm2058, %v2943, 0.0
    %v2949 = vrot.slane %v2948, 4
    %v2950 = vadd.f32 %v2948, %v2949
    %v2951 = vrot.slane %v2950, 2
    %v2952 = vadd.f32 %v2950, %v2951
    %v2953 = vrot.slane %v2952, 1
    %v2954 = vadd.f32 %v2952, %v2953
    %v2955 = vmul.f32 %v2954, 0.5
    %v2956 = vmul.f32 %v2943, %v2943
    %v2957 = vsel %vm2058, %v2956, 0.0
    %v2958 = vrot.slane %v2957, 4
    %v2959 = vadd.f32 %v2957, %v2958
    %v2960 = vrot.slane %v2959, 2
    %v2961 = vadd.f32 %v2959, %v2960
    %v2962 = vrot.slane %v2961, 1
    %v2963 = vadd.f32 %v2961, %v2962
    %v2964 = vmul.f32 %v2963, 0.5
    %v2965 = vmul.f32 %v2955, %v2955
    %v2966 = vsub.f32 %v2964, %v2965
    %v2967 = vmax.f32 %v2966, 0.0
    %v2968 = vsub.f32 %v2943, %v2955
    %v2969 = vadd.f32 %v2967, 1e-05
    %v2970 = vrsqrt.pop %v2969
    %v2971 = vmul.f32 %v2968, %v2970
    %v2972 = vld [vmem:[%s11] sm:$0x1]
    %v2974 = vlaneseq
    %v2975 = vshrl.u32 %v2974, 7
    %v2976 = vsub.s32 0, %v2975
    %v2977 = vrot.slane %v2972, %v2976
    %v2979 = vmul.f32 %v2971, %v2977
    %v2980 = vld [vmem:[%s12] sm:$0x1]
    %v2982 = vlaneseq
    %v2983 = vshrl.u32 %v2982, 7
    %v2984 = vsub.s32 0, %v2983
    %v2985 = vrot.slane %v2980, %v2984
    %v2987 = vadd.f32 %v2979, %v2985
    %v2988 = vmax.f32 %v2987, 0.0
    %v2989 = vpack.c.bf16 %v2988, %v2988
    %v2990 = vld [vmem:[#allocation10] sm:$0xf]
    %v2991 = vld [vmem:[#allocation10 + $0x4] sm:$0xf]
    %v2992 = vld [vmem:[#allocation10 + $0x8] sm:$0xf]
    %v2993 = vld [vmem:[#allocation10 + $0xc] sm:$0xf]
    %v2994 = vld [vmem:[#allocation10 + $0x10] sm:$0xf]
    %v2995 = vld [vmem:[#allocation10 + $0x14] sm:$0xf]
    %v2996 = vld [vmem:[#allocation10 + $0x18] sm:$0xf]
    %v2997 = vld [vmem:[#allocation10 + $0x1c] sm:$0xf]
    %v2998 = vld [vmem:[#allocation10 + $0x20] sm:$0xf]
    %v2999 = vld [vmem:[#allocation10 + $0x24] sm:$0xf]
    %v3000 = vld [vmem:[#allocation10 + $0x28] sm:$0xf]
    %v3001 = vld [vmem:[#allocation10 + $0x2c] sm:$0xf]
    %v3002 = vld [vmem:[#allocation10 + $0x30] sm:$0xf]
    %v3003 = vld [vmem:[#allocation10 + $0x34] sm:$0xf]
    %v3004 = vld [vmem:[#allocation10 + $0x38] sm:$0xf]
    %v3005 = vld [vmem:[#allocation10 + $0x3c] sm:$0xf]
    %v3006 = vld [vmem:[%s14] sm:$0x1]
    %v3008 = vlaneseq
    %v3009 = vshrl.u32 %v3008, 7
    %v3010 = vsub.s32 0, %v3009
    %v3011 = vrot.slane %v3006, %v3010
    %v3029 = vunpack.c.l.b16 %v2990
    %v3030 = vunpack.c.l.b16 %v2991
    %v3031 = vunpack.c.l.b16 %v2992
    %v3032 = vunpack.c.l.b16 %v2993
    %v3033 = vunpack.c.l.b16 %v2994
    %v3034 = vunpack.c.l.b16 %v2995
    %v3035 = vunpack.c.l.b16 %v2996
    %v3036 = vunpack.c.l.b16 %v2997
    %v3037 = vunpack.c.l.b16 %v2998
    %v3038 = vunpack.c.l.b16 %v2999
    %v3039 = vunpack.c.l.b16 %v3000
    %v3040 = vunpack.c.l.b16 %v3001
    %v3041 = vunpack.c.l.b16 %v3002
    %v3042 = vunpack.c.l.b16 %v3003
    %v3043 = vunpack.c.l.b16 %v3004
    %v3044 = vunpack.c.l.b16 %v3005
    %v3045 = vpack.c.b16 %v3030, %v3029
    %v3046 = vpack.c.b16 %v3032, %v3031
    %v3047 = vpack.c.b16 %v3034, %v3033
    %v3048 = vpack.c.b16 %v3036, %v3035
    %v3049 = vpack.c.b16 %v3038, %v3037
    %v3050 = vpack.c.b16 %v3040, %v3039
    %v3051 = vpack.c.b16 %v3042, %v3041
    %v3052 = vpack.c.b16 %v3044, %v3043
    %3061 = vmatprep.subr.bf16.mxu0 0
    %3062 = vmatpush1.bf16.msra.mxu0 %v3045
    %3063 = vmatprep.subr.bf16.mxu0 0
    %3064 = vmatpush1.bf16.msra.mxu0 %v3046
    %3065 = vmatprep.subr.bf16.mxu0 0
    %3066 = vmatpush1.bf16.msra.mxu0 %v3047
    %3067 = vmatprep.subr.bf16.mxu0 0
    %3068 = vmatpush1.bf16.msra.mxu0 %v3048
    %3069 = vmatprep.subr.bf16.mxu0 0
    %3070 = vmatpush1.bf16.msra.mxu0 %v3049
    %3071 = vmatprep.subr.bf16.mxu0 0
    %3072 = vmatpush1.bf16.msra.mxu0 %v3050
    %3073 = vmatprep.subr.bf16.mxu0 0
    %3074 = vmatpush1.bf16.msra.mxu0 %v3051
    %3075 = vmatprep.subr.bf16.mxu0 0
    %3076 = vmatpush1.bf16.msra.mxu0 %v3052
    %3077 = vmatprep.subr.bf16.mxu0 0
    %3078 = vmatpush1.bf16.msra.mxu0 0
    %3079 = vmatprep.subr.bf16.mxu0 0
    %3080 = vmatpush1.bf16.msra.mxu0 0
    %3081 = vmatprep.subr.bf16.mxu0 0
    %3082 = vmatpush1.bf16.msra.mxu0 0
    %3083 = vmatprep.subr.bf16.mxu0 0
    %3084 = vmatpush1.bf16.msra.mxu0 0
    %3085 = vmatprep.subr.bf16.mxu0 0
    %3086 = vmatpush1.bf16.msra.mxu0 0
    %3087 = vmatprep.subr.bf16.mxu0 0
    %3088 = vmatpush1.bf16.msra.mxu0 0
    %3089 = vmatprep.subr.bf16.mxu0 0
    %3090 = vmatpush1.bf16.msra.mxu0 0
    %3091 = vmatprep.subr.bf16.mxu0 0
    %3092 = vmatpush1.bf16.msra.mxu0 0
    %3093 = vmatprep.mubr.bf16.mxu0 0
    %3094 = vmatmul.mubr.bf16.gmra.mrb[0].mxu0 %v2989
    %v3095 = vpop.f32.mrb[0].mxu0
    %v3096 = vadd.f32 %v3011, %v3095
    %v3097 = vpop.f32.mrb[0].mxu0
    %v3098 = vpop.f32.mrb[0].mxu0
    %v3099 = vpop.f32.mrb[0].mxu0
    %3100 = vdwg.mxu0
    %3101 = vst [vmem:[#allocation11] sm:$0x3] %v3096
    // Predicated region
    $region82: #{tpu_custom_call.1} parent=1 // pred_check
      _
    $region83: #{tpu_custom_call.1} parent=1 // pred_check_branch
      %3103 = sbr.rel (0) target = $region85
    $region84: #{tpu_custom_call.1} parent=1 // pred_region
      %s3105 = ssub.s32 32, 32
      %3106 = vsyncadd [#allocation4], %s3105
      %s3108 = sshll.u32 [#allocation11], 4
      %s3109 = int_to_ptr.vmem [resolvable:$true] %s3108
      %3111 = dma.vmem_to_hbm [thread:$0]  %s3109, 32, %s15, [#allocation4]
    $region85: #{tpu_custom_call.1} parent=1 // pred_fallthru
      _
    // Predicated region
    $region86: #{tpu_custom_call.1} parent=1 // pred_check
      _
    $region87: #{tpu_custom_call.1} parent=1 // pred_check_branch
      %3113 = sbr.rel (0) target = $region89
    $region88: #{tpu_custom_call.1} parent=1 // pred_region
      %3114 = dma.done [#allocation4], 32
    $region89: #{tpu_custom_call.1} parent=1 // pred_fallthru
      _
    %3115 = vsyncpa [#allocation3], 1
    %3116 = vsyncpa [#allocation6], 1
    %3117 = vsyncpa [#allocation9], 1
    %3118 = vsyncpa [#allocation4], 1

</llo_original>
